<compile_context>
chip_gen: v7x
topology: tpu7x:2x2x1
jax: 0.10.0
libtpu: 0.0.40
codegen_flags: <defaults>
</compile_context>

<pallas_src>
from functools import partial

import numpy as np
import jax
import jax.numpy as jnp
from jax.experimental import pallas as pl
from jax.experimental.pallas import tpu as pltpu


# ---------------------------------------------------------------------------
# Host-side packing: express the 3-D conv / transposed conv as lane-space
# matmuls with the H/W edge padding folded into the weights.
# ---------------------------------------------------------------------------

def _pad_matrix(H, W, C):
    """0/1 matrix (H*W*C, (H+2)*(W+2)*C): unpadded plane -> edge-padded plane."""
    L, Lp = H * W * C, (H + 2) * (W + 2) * C
    P = np.zeros((L, Lp), np.float64)
    for hp in range(H + 2):
        hs = min(max(hp - 1, 0), H - 1)
        for wp in range(W + 2):
            ws = min(max(wp - 1, 0), W - 1)
            for c in range(C):
                P[hs * W * C + ws * C + c, hp * (W + 2) * C + wp * C + c] = 1.0
    return P


def _pack_conv(w, b, H, W, pmat):
    """w: (3,3,3,Cin,Cout), b: (Cout,), pmat: (H*W*Cin, (H+2)*(W+2)*Cin).

    Returns a (3*H*W*Cin, H*W*Cout) weight with H/W edge padding folded in
    (vertical stack over the 3 depth taps) and the bias tiled to a lane row.
    """
    w = np.asarray(w, np.float64)
    Cin, Cout = w.shape[3], w.shape[4]
    Lp, L = (H + 2) * (W + 2) * Cin, H * W * Cout
    wk = np.zeros((3, Lp, L), np.float64)
    h = np.arange(H)[:, None]
    wc = np.arange(W)[None, :]
    for kd in range(3):
        for kh in range(3):
            for kw in range(3):
                in_base = (h + kh) * ((W + 2) * Cin) + (wc + kw) * Cin
                out_base = h * (W * Cout) + wc * Cout
                for ci in range(Cin):
                    for co in range(Cout):
                        wk[kd, in_base + ci, out_base + co] += w[kd, kh, kw, ci, co]
    folded = np.concatenate([pmat @ wk[0], pmat @ wk[1], pmat @ wk[2]], axis=0)
    return folded.astype(np.float32), np.tile(np.asarray(b, np.float32), H * W)


def _pack_deconv(w, b, H, W):
    """w: (2,2,2,Cin,Cout), b: (Cout,) -> (H*W*Cin, 2*Lout), (1, 2*Lout).

    The two depth taps are concatenated along output lanes: lane block
    [kd*Lout : (kd+1)*Lout] holds the output depth plane 2*d + kd.
    """
    w = np.asarray(w, np.float32)
    Cin, Cout = w.shape[3], w.shape[4]
    L, Lo = H * W * Cin, (2 * H) * (2 * W) * Cout
    dk = np.zeros((2, L, Lo), np.float32)
    h = np.arange(H)[:, None]
    wc = np.arange(W)[None, :]
    for kd in range(2):
        for kh in range(2):
            for kw in range(2):
                in_base = h * (W * Cin) + wc * Cin
                out_base = (2 * h + kh) * (2 * W * Cout) + (2 * wc + kw) * Cout
                for ci in range(Cin):
                    for co in range(Cout):
                        dk[kd, in_base + ci, out_base + co] += w[kd, kh, kw, ci, co]
    brow = np.tile(np.asarray(b, np.float32), (2 * H) * (2 * W))
    return (np.concatenate([dk[0], dk[1]], axis=1),
            np.concatenate([brow, brow])[None, :])


def pack_params(params, H, W, C):
    """Pack module weights into the lane-space matrices used by the fused kernel."""
    basic, res, dec = params["basic"], params["basic"]["res"], params["deconv"]
    pmat = _pad_matrix(H, W, C)
    stages = [
        (basic["w1"], basic["b1"], basic["bn1"]),   # basic.conv1 / bn1
        (res["w1"], res["b1"], res["bn1"]),         # resid.conv1 / bn1
        (res["w2"], res["b2"], res["bn2"]),         # resid.conv2 / bn2
        (res["w3"], res["b3"], res["bn3"]),         # resid.conv3 / bn3
        (basic["w2"], basic["b2"], basic["bn2"]),   # basic.conv2 / bn2
    ]
    cw, sv = [], []
    for w, b, bn in stages:
        wf, brow = _pack_conv(w, b, H, W, pmat)
        cw.append(wf)
        sv.append(np.stack([
            brow,
            np.tile(np.asarray(bn["g"], np.float32), H * W),
            np.tile(np.asarray(bn["b"], np.float32), H * W),
        ]))
    dw, db = _pack_deconv(dec["w"], dec["b"], H, W)
    return dict(
        conv_w=jnp.asarray(np.stack(cw)),       # (5, 3L, L)
        stage_vec=jnp.asarray(np.stack(sv)),    # (5, 3, L)  rows: bias, gamma, beta
        deconv_w=jnp.asarray(dw),               # (L, 2*Lo)
        deconv_b=jnp.asarray(db),               # (1, 2*Lo)
    )


# ---------------------------------------------------------------------------
# The fused Pallas kernel: grid over the 5 conv stages (weights stream in per
# stage and overlap compute); activations live in persistent VMEM scratch; the
# ConvTranspose3d runs in the last grid step.
# ---------------------------------------------------------------------------

def _decoding_layer_kernel(x_ref, cw_ref, sv_ref, dw_ref, db_ref,
                           out_ref, cur_ref, h1_ref, *, N, D, C, inv_count):
    s = pl.program_id(0)
    last = pl.num_programs(0) - 1
    f32 = jnp.float32

    @pl.when(s == 0)
    def _():
        cur_ref[...] = x_ref[...]
        h1_ref[...] = jnp.zeros_like(h1_ref)

    a = cur_ref[...]                                   # (N*D, L)
    L = a.shape[-1]

    # Depth halo (edge replication) as cheap sublane concats; one tap operand
    # (N*D, 3L) = [d-1 | d | d+1] per row; depth shifts never cross batches.
    prev_parts, next_parts = [], []
    for n in range(N):
        blk = a[n * D:(n + 1) * D]
        prev_parts.append(jnp.concatenate([blk[0:1], blk[0:D - 1]], axis=0))
        next_parts.append(jnp.concatenate([blk[1:D], blk[D - 1:D]], axis=0))
    taps = jnp.concatenate(
        [jnp.concatenate(prev_parts, axis=0), a,
         jnp.concatenate(next_parts, axis=0)], axis=1)  # (N*D, 3L)

    # Conv3d (k=3, edge pad folded into weights) + bias + ReLU: ONE matmul.
    sv = sv_ref[0]                                     # (3, L): bias, gamma, beta
    conv = jnp.dot(taps, cw_ref[0], preferred_element_type=f32) + sv[0:1]
    post = jnp.maximum(conv, 0.0)

    # BatchNorm3d, training-mode batch stats (biased var, eps=1e-5).
    # Per-channel sums of x and x^2 via a period-C circular roll-reduce on the
    # XLU; result is already broadcast across all lanes of each channel.
    stats = jnp.concatenate(
        [jnp.sum(post, axis=0, keepdims=True),
         jnp.sum(post * post, axis=0, keepdims=True)], axis=0)   # (2, L)
    shift = C
    while shift < L:
        stats = stats + pltpu.roll(stats, shift=shift, axis=1)
        shift *= 2
    mean = stats[0:1] * inv_count
    var = jnp.maximum(stats[1:2] * inv_count - mean * mean, 0.0)
    scale = sv[1:2] * jax.lax.rsqrt(var + 1e-5)
    y = post * scale + (sv[2:3] - mean * scale)

    # Residual add after the third residual conv (grid step 3): y += h1.
    y = y + jnp.where(s == 3, h1_ref[...], 0.0)

    cur_ref[...] = y

    @pl.when(s == 0)
    def _():
        h1_ref[...] = y                                # basic.bn1 output (residual)

    # Last grid step: ConvTranspose3d(k=2, s=2) as one lane-space matmul.
    @pl.when(s == last)
    def _():
        o = jnp.dot(y, dw_ref[...], preferred_element_type=f32) + db_ref[...]
        out_ref[...] = o.astype(out_ref.dtype)


def decoding_layer_forward(x, packed):
    """x: (N, D, H, W, C) NDHWC. Returns (N, 2D, 2H, 2W, C//2)."""
    N, D, H, W, C = x.shape
    L = H * W * C
    Lo2 = packed["deconv_w"].shape[-1]                 # 2 * (2H)(2W)*Cout
    Cout = Lo2 // (2 * (2 * H) * (2 * W))
    assert (H * W) & (H * W - 1) == 0, "roll-reduce needs H*W to be a power of 2"
    assert L % 128 == 0, "lane dim should be a multiple of 128"

    out = pl.pallas_call(
        partial(_decoding_layer_kernel, N=N, D=D, C=C,
                inv_count=1.0 / float(N * D * H * W)),
        out_shape=jax.ShapeDtypeStruct((N * D, Lo2), jnp.float32),
        grid_spec=pltpu.PrefetchScalarGridSpec(
            num_scalar_prefetch=0,
            grid=(5,),                                 # 5 conv stages; deconv at step 4
            in_specs=[
                pl.BlockSpec((N * D, L), lambda s: (0, 0)),          # x (resident)
                pl.BlockSpec((1, 3 * L, L), lambda s: (s, 0, 0)),    # conv_w[stage]
                pl.BlockSpec((1, 3, L), lambda s: (s, 0, 0)),        # bias/gamma/beta
                pl.BlockSpec((L, Lo2), lambda s: (0, 0)),            # deconv_w
                pl.BlockSpec((1, Lo2), lambda s: (0, 0)),            # deconv_b
            ],
            out_specs=pl.BlockSpec((N * D, Lo2), lambda s: (0, 0)),
            scratch_shapes=[pltpu.VMEM((N * D, L), jnp.float32),     # running activation
                            pltpu.VMEM((N * D, L), jnp.float32)],    # residual (h1)
        ),
        compiler_params=pltpu.CompilerParams(
            dimension_semantics=("arbitrary",)),
    )(x.reshape(N * D, L).astype(jnp.float32),
      packed["conv_w"], packed["stage_vec"],
      packed["deconv_w"], packed["deconv_b"])

    # Row (n, d), lane block kd*Lo + (2h+kh, 2w+kw, cout)  ->  depth = 2d + kd,
    # so a pure reshape recovers NDHWC (no transpose needed).
    return out.reshape(N, 2 * D, 2 * H, 2 * W, Cout)


# ---------------------------------------------------------------------------
# Deterministic parameter init (shapes follow the PyTorch __init__)
# ---------------------------------------------------------------------------

def init_params(key, c):
    keys = iter(jax.random.split(key, 32))

    def w3(cin, cout):
        return 0.1 * jax.random.normal(next(keys), (3, 3, 3, cin, cout), jnp.float32)

    def vec(n):
        return 0.1 * jax.random.normal(next(keys), (n,), jnp.float32)

    def bn(n):
        return dict(
            g=1.0 + 0.1 * jax.random.normal(next(keys), (n,), jnp.float32),
            b=0.1 * jax.random.normal(next(keys), (n,), jnp.float32),
        )

    res = dict(
        w1=w3(c, c), b1=vec(c), bn1=bn(c),
        w2=w3(c, c), b2=vec(c), bn2=bn(c),
        w3=w3(c, c), b3=vec(c), bn3=bn(c),
    )
    basic = dict(
        w1=w3(c, c), b1=vec(c), bn1=bn(c),
        res=res,
        w2=w3(c, c), b2=vec(c), bn2=bn(c),
    )
    deconv = dict(
        w=0.1 * jax.random.normal(next(keys), (2, 2, 2, c, c // 2), jnp.float32),
        b=vec(c // 2),
    )
    return dict(basic=basic, deconv=deconv)


# ---------------------------------------------------------------------------
# Pure-JAX reference (same semantics) used as an in-script sanity check.
# ---------------------------------------------------------------------------

def _reference_forward(x, params):
    hi = jax.lax.Precision.HIGHEST

    def conv(h, w, b):
        D, H, W = h.shape[1:4]
        hp = jnp.pad(h, ((0, 0), (1, 1), (1, 1), (1, 1), (0, 0)), mode="edge")
        out = None
        for kd in range(3):
            for kh in range(3):
                for kw in range(3):
                    tap = hp[:, kd:kd + D, kh:kh + H, kw:kw + W, :]
                    c = jnp.einsum("ndhwc,co->ndhwo", tap, w[kd, kh, kw], precision=hi)
                    out = c if out is None else out + c
        return out + b

    def relu_bn(h, g, b):
        h = jnp.maximum(h, 0.0)
        m = jnp.mean(h, axis=(0, 1, 2, 3), keepdims=True)
        v = jnp.mean(jnp.square(h - m), axis=(0, 1, 2, 3), keepdims=True)
        return (h - m) * jax.lax.rsqrt(v + 1e-5) * g + b

    basic, res, dec = params["basic"], params["basic"]["res"], params["deconv"]
    h1 = relu_bn(conv(x, basic["w1"], basic["b1"]), basic["bn1"]["g"], basic["bn1"]["b"])
    t = relu_bn(conv(h1, res["w1"], res["b1"]), res["bn1"]["g"], res["bn1"]["b"])
    t = relu_bn(conv(t, res["w2"], res["b2"]), res["bn2"]["g"], res["bn2"]["b"])
    t = relu_bn(conv(t, res["w3"], res["b3"]), res["bn3"]["g"], res["bn3"]["b"])
    h2 = t + h1
    h3 = relu_bn(conv(h2, basic["w2"], basic["b2"]), basic["bn2"]["g"], basic["bn2"]["b"])
    N, D, H, W, _ = h3.shape
    y = jnp.einsum("ndhwc,pqrco->ndphqwro", h3, dec["w"], precision=hi)
    return y.reshape(N, 2 * D, 2 * H, 2 * W, -1) + dec["b"]


if __name__ == "__main__":
    key = jax.random.PRNGKey(0)
    kx, kp = jax.random.split(key)

    # features_in = 4; PyTorch input NCDHW (2, 4, 8, 8, 8) held as NDHWC.
    N, C, D, H, W = 2, 4, 8, 8, 8
    x = jax.random.normal(kx, (N, D, H, W, C), jnp.float32)
    params = init_params(kp, C)
    packed = pack_params(params, H, W, C)

    fwd = jax.jit(decoding_layer_forward)
    out = fwd(x, packed)
    jax.block_until_ready(out)

    assert out.shape == (N, 2 * D, 2 * H, 2 * W, C // 2), out.shape
    assert out.dtype == jnp.float32

    ref = jax.jit(_reference_forward)(x, params)
    err = float(jnp.max(jnp.abs(out - ref)))
    assert err < 1e-2, f"max |pallas - reference| = {err}"

    print("KERNEL_OK")
</pallas_src>

<mosaic_0001>
module attributes {stable_mosaic.version = 11 : i64} {
  func.func @_decoding_layer_kernel(%arg0: i32, %arg1: memref<16x256xf32, #tpu.memory_space<vmem>>, %arg2: memref<1x768x256xf32, #tpu.memory_space<vmem>>, %arg3: memref<1x3x256xf32, #tpu.memory_space<vmem>>, %arg4: memref<256x1024xf32, #tpu.memory_space<vmem>>, %arg5: memref<1x1024xf32, #tpu.memory_space<vmem>>, %arg6: memref<16x1024xf32, #tpu.memory_space<vmem>>, %arg7: memref<16x256xf32, #tpu.memory_space<vmem>>, %arg8: memref<16x256xf32, #tpu.memory_space<vmem>>) attributes {dimension_semantics = [#tpu.dimension_semantics<arbitrary>], iteration_bounds = array<i64: 5>, scalar_prefetch = 0 : i64, scratch_operands = 2 : i64, tpu.core_type = #tpu.core_type<tc>, window_params = [{pipeline_mode = #tpu.pipeline_mode<synchronous>, transform_indices = @transform_0, window_bounds = array<i64: 16, 256>}, {transform_indices = @transform_1, window_bounds = array<i64: 1, 768, 256>}, {transform_indices = @transform_2, window_bounds = array<i64: 1, 3, 256>}, {pipeline_mode = #tpu.pipeline_mode<synchronous>, transform_indices = @transform_3, window_bounds = array<i64: 256, 1024>}, {pipeline_mode = #tpu.pipeline_mode<synchronous>, transform_indices = @transform_4, window_bounds = array<i64: 1, 1024>}, {pipeline_mode = #tpu.pipeline_mode<synchronous>, transform_indices = @transform_5, window_bounds = array<i64: 16, 1024>}]} {
    %c0_i32 = arith.constant 0 : i32
    %0 = arith.cmpi eq, %arg0, %c0_i32 : i32
    %1 = arith.extui %0 : i1 to i32
    %c0_i32_0 = arith.constant 0 : i32
    %2 = arith.cmpi ne, %1, %c0_i32_0 : i32
    scf.if %2 {
      %c0_24 = arith.constant 0 : index
      %c0_25 = arith.constant 0 : index
      %83 = vector.load %arg1[%c0_24, %c0_25] : memref<16x256xf32, #tpu.memory_space<vmem>>, vector<16x256xf32>
      %c0_26 = arith.constant 0 : index
      %c0_27 = arith.constant 0 : index
      %84 = vector.load %arg7[%c0_26, %c0_27] : memref<16x256xf32, #tpu.memory_space<vmem>>, vector<16x256xf32>
      tpu.vector_store %arg7[%c0_26, %c0_27], %83 {strides = array<i32>} : memref<16x256xf32, #tpu.memory_space<vmem>>, vector<16x256xf32>,
      %cst_28 = arith.constant 0.000000e+00 : f32
      %85 = vector.broadcast %cst_28 : f32 to vector<16x256xf32>
      %c0_29 = arith.constant 0 : index
      %c0_30 = arith.constant 0 : index
      %86 = vector.load %arg8[%c0_29, %c0_30] : memref<16x256xf32, #tpu.memory_space<vmem>>, vector<16x256xf32>
      tpu.vector_store %arg8[%c0_29, %c0_30], %85 {strides = array<i32>} : memref<16x256xf32, #tpu.memory_space<vmem>>, vector<16x256xf32>,
    } else {
    }
    %c0 = arith.constant 0 : index
    %c0_1 = arith.constant 0 : index
    %3 = vector.load %arg7[%c0, %c0_1] : memref<16x256xf32, #tpu.memory_space<vmem>>, vector<16x256xf32>
    %4 = vector.extract_strided_slice %3 {offsets = [0, 0], sizes = [8, 256], strides = [1, 1]} : vector<16x256xf32> to vector<8x256xf32>
    %5 = vector.extract_strided_slice %4 {offsets = [0, 0], sizes = [1, 256], strides = [1, 1]} : vector<8x256xf32> to vector<1x256xf32>
    %6 = vector.extract_strided_slice %4 {offsets = [0, 0], sizes = [7, 256], strides = [1, 1]} : vector<8x256xf32> to vector<7x256xf32>
    %7 = tpu.concatenate %5, %6 in 0 : vector<1x256xf32>, vector<7x256xf32> -> vector<8x256xf32>
    %8 = vector.extract_strided_slice %4 {offsets = [1, 0], sizes = [7, 256], strides = [1, 1]} : vector<8x256xf32> to vector<7x256xf32>
    %9 = vector.extract_strided_slice %4 {offsets = [7, 0], sizes = [1, 256], strides = [1, 1]} : vector<8x256xf32> to vector<1x256xf32>
    %10 = tpu.concatenate %8, %9 in 0 : vector<7x256xf32>, vector<1x256xf32> -> vector<8x256xf32>
    %11 = vector.extract_strided_slice %3 {offsets = [8, 0], sizes = [8, 256], strides = [1, 1]} : vector<16x256xf32> to vector<8x256xf32>
    %12 = vector.extract_strided_slice %11 {offsets = [0, 0], sizes = [1, 256], strides = [1, 1]} : vector<8x256xf32> to vector<1x256xf32>
    %13 = vector.extract_strided_slice %11 {offsets = [0, 0], sizes = [7, 256], strides = [1, 1]} : vector<8x256xf32> to vector<7x256xf32>
    %14 = tpu.concatenate %12, %13 in 0 : vector<1x256xf32>, vector<7x256xf32> -> vector<8x256xf32>
    %15 = vector.extract_strided_slice %11 {offsets = [1, 0], sizes = [7, 256], strides = [1, 1]} : vector<8x256xf32> to vector<7x256xf32>
    %16 = vector.extract_strided_slice %11 {offsets = [7, 0], sizes = [1, 256], strides = [1, 1]} : vector<8x256xf32> to vector<1x256xf32>
    %17 = tpu.concatenate %15, %16 in 0 : vector<7x256xf32>, vector<1x256xf32> -> vector<8x256xf32>
    %18 = tpu.concatenate %7, %14 in 0 : vector<8x256xf32>, vector<8x256xf32> -> vector<16x256xf32>
    %19 = tpu.concatenate %10, %17 in 0 : vector<8x256xf32>, vector<8x256xf32> -> vector<16x256xf32>
    %20 = tpu.concatenate %18, %3, %19 in 1 : vector<16x256xf32>, vector<16x256xf32>, vector<16x256xf32> -> vector<16x768xf32>
    %c0_2 = arith.constant 0 : index
    %c0_3 = arith.constant 0 : index
    %c0_4 = arith.constant 0 : index
    %21 = vector.load %arg3[%c0_2, %c0_3, %c0_4] : memref<1x3x256xf32, #tpu.memory_space<vmem>>, vector<1x3x256xf32>
    %22 = vector.shape_cast %21 : vector<1x3x256xf32> to vector<3x256xf32>
    %c0_5 = arith.constant 0 : index
    %c0_6 = arith.constant 0 : index
    %c0_7 = arith.constant 0 : index
    %23 = vector.load %arg2[%c0_5, %c0_6, %c0_7] : memref<1x768x256xf32, #tpu.memory_space<vmem>>, vector<1x768x256xf32>
    %24 = vector.shape_cast %23 : vector<1x768x256xf32> to vector<768x256xf32>
    %cst = arith.constant dense<0.000000e+00> : vector<16x256xf32>
    %25 = tpu.matmul %20, %24, %cst {dimension_numbers = #tpu.dot_dimension_numbers<[1], [0], [0], [1], [0, 0, 1, 1], [], []>} : vector<16x768xf32>, vector<768x256xf32>, vector<16x256xf32> -> vector<16x256xf32>
    %26 = vector.extract_strided_slice %22 {offsets = [0, 0], sizes = [1, 256], strides = [1, 1]} : vector<3x256xf32> to vector<1x256xf32>
    %27 = vector.broadcast %26 : vector<1x256xf32> to vector<16x256xf32>
    %28 = arith.addf %25, %27 : vector<16x256xf32>
    %cst_8 = arith.constant 0.000000e+00 : f32
    %29 = vector.broadcast %cst_8 : f32 to vector<16x256xf32>
    %30 = arith.maximumf %28, %29 : vector<16x256xf32>
    %cst_9 = arith.constant dense<0.000000e+00> : vector<256xf32>
    %31 = vector.multi_reduction <add>, %30, %cst_9 [0] : vector<16x256xf32> to vector<256xf32>
    %32 = vector.shape_cast %31 : vector<256xf32> to vector<1x256xf32>
    %33 = arith.mulf %30, %30 : vector<16x256xf32>
    %cst_10 = arith.constant dense<0.000000e+00> : vector<256xf32>
    %34 = vector.multi_reduction <add>, %33, %cst_10 [0] : vector<16x256xf32> to vector<256xf32>
    %35 = vector.shape_cast %34 : vector<256xf32> to vector<1x256xf32>
    %36 = tpu.concatenate %32, %35 in 0 : vector<1x256xf32>, vector<1x256xf32> -> vector<2x256xf32>
    %c4_i32 = arith.constant 4 : i32
    %37 = tpu.dynamic_rotate %36 by %c4_i32 dim 1 : vector<2x256xf32>, i32 -> vector<2x256xf32>
    %38 = arith.addf %36, %37 : vector<2x256xf32>
    %c8_i32 = arith.constant 8 : i32
    %39 = tpu.dynamic_rotate %38 by %c8_i32 dim 1 : vector<2x256xf32>, i32 -> vector<2x256xf32>
    %40 = arith.addf %38, %39 : vector<2x256xf32>
    %c16_i32 = arith.constant 16 : i32
    %41 = tpu.dynamic_rotate %40 by %c16_i32 dim 1 : vector<2x256xf32>, i32 -> vector<2x256xf32>
    %42 = arith.addf %40, %41 : vector<2x256xf32>
    %c32_i32 = arith.constant 32 : i32
    %43 = tpu.dynamic_rotate %42 by %c32_i32 dim 1 : vector<2x256xf32>, i32 -> vector<2x256xf32>
    %44 = arith.addf %42, %43 : vector<2x256xf32>
    %c64_i32 = arith.constant 64 : i32
    %45 = tpu.dynamic_rotate %44 by %c64_i32 dim 1 : vector<2x256xf32>, i32 -> vector<2x256xf32>
    %46 = arith.addf %44, %45 : vector<2x256xf32>
    %c128_i32 = arith.constant 128 : i32
    %47 = tpu.dynamic_rotate %46 by %c128_i32 dim 1 : vector<2x256xf32>, i32 -> vector<2x256xf32>
    %48 = arith.addf %46, %47 : vector<2x256xf32>
    %49 = vector.extract_strided_slice %48 {offsets = [0, 0], sizes = [1, 256], strides = [1, 1]} : vector<2x256xf32> to vector<1x256xf32>
    %cst_11 = arith.constant 9.765625E-4 : f32
    %50 = vector.broadcast %cst_11 : f32 to vector<1x256xf32>
    %51 = arith.mulf %49, %50 : vector<1x256xf32>
    %52 = vector.extract_strided_slice %48 {offsets = [1, 0], sizes = [1, 256], strides = [1, 1]} : vector<2x256xf32> to vector<1x256xf32>
    %cst_12 = arith.constant 9.765625E-4 : f32
    %53 = vector.broadcast %cst_12 : f32 to vector<1x256xf32>
    %54 = arith.mulf %52, %53 : vector<1x256xf32>
    %55 = arith.mulf %51, %51 : vector<1x256xf32>
    %56 = arith.subf %54, %55 : vector<1x256xf32>
    %cst_13 = arith.constant 0.000000e+00 : f32
    %57 = vector.broadcast %cst_13 : f32 to vector<1x256xf32>
    %58 = arith.maximumf %56, %57 : vector<1x256xf32>
    %59 = vector.extract_strided_slice %22 {offsets = [1, 0], sizes = [1, 256], strides = [1, 1]} : vector<3x256xf32> to vector<1x256xf32>
    %cst_14 = arith.constant 9.99999974E-6 : f32
    %60 = vector.broadcast %cst_14 : f32 to vector<1x256xf32>
    %61 = arith.addf %58, %60 : vector<1x256xf32>
    %62 = math.rsqrt %61 : vector<1x256xf32>
    %63 = arith.mulf %59, %62 : vector<1x256xf32>
    %64 = vector.broadcast %63 : vector<1x256xf32> to vector<16x256xf32>
    %65 = arith.mulf %30, %64 : vector<16x256xf32>
    %66 = vector.extract_strided_slice %22 {offsets = [2, 0], sizes = [1, 256], strides = [1, 1]} : vector<3x256xf32> to vector<1x256xf32>
    %67 = arith.mulf %51, %63 : vector<1x256xf32>
    %68 = arith.subf %66, %67 : vector<1x256xf32>
    %69 = vector.broadcast %68 : vector<1x256xf32> to vector<16x256xf32>
    %70 = arith.addf %65, %69 : vector<16x256xf32>
    %c3_i32 = arith.constant 3 : i32
    %71 = arith.cmpi eq, %arg0, %c3_i32 : i32
    %c0_15 = arith.constant 0 : index
    %c0_16 = arith.constant 0 : index
    %72 = vector.load %arg8[%c0_15, %c0_16] : memref<16x256xf32, #tpu.memory_space<vmem>>, vector<16x256xf32>
    %cst_17 = arith.constant 0.000000e+00 : f32
    %73 = vector.broadcast %cst_17 : f32 to vector<16x256xf32>
    %74 = arith.select %71, %72, %73 : vector<16x256xf32>
    %75 = arith.addf %70, %74 : vector<16x256xf32>
    %c0_18 = arith.constant 0 : index
    %c0_19 = arith.constant 0 : index
    %76 = vector.load %arg7[%c0_18, %c0_19] : memref<16x256xf32, #tpu.memory_space<vmem>>, vector<16x256xf32>
    tpu.vector_store %arg7[%c0_18, %c0_19], %75 {strides = array<i32>} : memref<16x256xf32, #tpu.memory_space<vmem>>, vector<16x256xf32>,
    %c0_i32_20 = arith.constant 0 : i32
    %77 = arith.cmpi eq, %arg0, %c0_i32_20 : i32
    %78 = arith.extui %77 : i1 to i32
    %c0_i32_21 = arith.constant 0 : i32
    %79 = arith.cmpi ne, %78, %c0_i32_21 : i32
    scf.if %79 {
      %c0_24 = arith.constant 0 : index
      %c0_25 = arith.constant 0 : index
      %83 = vector.load %arg8[%c0_24, %c0_25] : memref<16x256xf32, #tpu.memory_space<vmem>>, vector<16x256xf32>
      tpu.vector_store %arg8[%c0_24, %c0_25], %75 {strides = array<i32>} : memref<16x256xf32, #tpu.memory_space<vmem>>, vector<16x256xf32>,
    } else {
    }
    %c4_i32_22 = arith.constant 4 : i32
    %80 = arith.cmpi eq, %arg0, %c4_i32_22 : i32
    %81 = arith.extui %80 : i1 to i32
    %c0_i32_23 = arith.constant 0 : i32
    %82 = arith.cmpi ne, %81, %c0_i32_23 : i32
    scf.if %82 {
      %c0_24 = arith.constant 0 : index
      %c0_25 = arith.constant 0 : index
      %83 = vector.load %arg4[%c0_24, %c0_25] : memref<256x1024xf32, #tpu.memory_space<vmem>>, vector<256x1024xf32>
      %cst_26 = arith.constant dense<0.000000e+00> : vector<16x1024xf32>
      %84 = tpu.matmul %75, %83, %cst_26 {dimension_numbers = #tpu.dot_dimension_numbers<[1], [0], [0], [1], [0, 0, 1, 1], [], []>} : vector<16x256xf32>, vector<256x1024xf32>, vector<16x1024xf32> -> vector<16x1024xf32>
      %c0_27 = arith.constant 0 : index
      %c0_28 = arith.constant 0 : index
      %85 = vector.load %arg5[%c0_27, %c0_28] : memref<1x1024xf32, #tpu.memory_space<vmem>>, vector<1x1024xf32>
      %86 = vector.broadcast %85 : vector<1x1024xf32> to vector<16x1024xf32>
      %87 = arith.addf %84, %86 : vector<16x1024xf32>
      %c0_29 = arith.constant 0 : index
      %c0_30 = arith.constant 0 : index
      %88 = vector.load %arg6[%c0_29, %c0_30] : memref<16x1024xf32, #tpu.memory_space<vmem>>, vector<16x1024xf32>
      tpu.vector_store %arg6[%c0_29, %c0_30], %87 {strides = array<i32>} : memref<16x1024xf32, #tpu.memory_space<vmem>>, vector<16x1024xf32>,
    } else {
    }
    return
  }
  func.func @transform_0(%arg0: i32) -> (i32, i32) {
    %c0_i32 = arith.constant 0 : i32
    %c0_i32_0 = arith.constant 0 : i32
    %c0_i32_1 = arith.constant 0 : i32
    return %c0_i32, %c0_i32_0 : i32, i32
  }
  func.func @transform_1(%arg0: i32) -> (i32, i32, i32) {
    %c0_i32 = arith.constant 0 : i32
    %c0_i32_0 = arith.constant 0 : i32
    %c0_i32_1 = arith.constant 0 : i32
    return %arg0, %c0_i32, %c0_i32_0 : i32, i32, i32
  }
  func.func @transform_2(%arg0: i32) -> (i32, i32, i32) {
    %c0_i32 = arith.constant 0 : i32
    %c0_i32_0 = arith.constant 0 : i32
    %c0_i32_1 = arith.constant 0 : i32
    return %arg0, %c0_i32, %c0_i32_0 : i32, i32, i32
  }
  func.func @transform_3(%arg0: i32) -> (i32, i32) {
    %c0_i32 = arith.constant 0 : i32
    %c0_i32_0 = arith.constant 0 : i32
    %c0_i32_1 = arith.constant 0 : i32
    return %c0_i32, %c0_i32_0 : i32, i32
  }
  func.func @transform_4(%arg0: i32) -> (i32, i32) {
    %c0_i32 = arith.constant 0 : i32
    %c0_i32_0 = arith.constant 0 : i32
    %c0_i32_1 = arith.constant 0 : i32
    return %c0_i32, %c0_i32_0 : i32, i32
  }
  func.func @transform_5(%arg0: i32) -> (i32, i32) {
    %c0_i32 = arith.constant 0 : i32
    %c0_i32_0 = arith.constant 0 : i32
    %c0_i32_1 = arith.constant 0 : i32
    return %c0_i32, %c0_i32_0 : i32, i32
  }
}

</mosaic_0001>

<llo_original>
// kernel: decoding_layer_forward.1
$region0: #{decoding_layer_forward.1}
  #allocation0 [shape = 'u32[]', space=smem, size = 0x4, offset = 0x4, fixed_abs, tag = 'smem constant byte address 0x4 - core index']
  #allocation1 [shape = 'u32[144,128]{1,0:T(1,128)}', space=vmem, size = 0x12000, scoped, tag = 'internal scratch']
  #allocation2 [shape = 'f32[16,256]{1,0:T(8,128)}', space=vmem, size = 0x4000, scoped, tag = 'scratch operand']
  #allocation3 [shape = 'f32[16,256]{1,0:T(8,128)}', space=vmem, size = 0x4000, scoped, tag = 'scratch operand']
  %s0 = inlined_call_operand.vmem [shape: f32[16,256], index: 0, kind: input, shape index: {}]
  %s1 = inlined_call_operand.hbm [shape: f32[5,768,256], index: 1, kind: input, shape index: {}]
  %s2 = inlined_call_operand.hbm [shape: f32[5,3,256], index: 2, kind: input, shape index: {}]
  %s3 = inlined_call_operand.hbm [shape: f32[256,1024], index: 3, kind: input, shape index: {}]
  %s4 = inlined_call_operand.hbm [shape: f32[1,1024], index: 4, kind: input, shape index: {}]
  %s5 = inlined_call_operand.vmem [shape: f32[16,1024], index: 5, kind: output, shape index: {}]
  %s6 = sld [smem:[#allocation0]]
  $region81: #{decoding_layer_forward.1} parent=0
    _
  %s8 = ssub.s32 1, %s6
  %s9 = scalar_select 0, %s8, %s6
  $region1: #{decoding_layer_forward.1} parent=0
    #allocation4 [shape = 'u8[1572864]{0}', space=vmem, size = 0x180000, scoped, tag = 'input window, operand 1']
    #allocation5 [shape = 's32[2]{0}', space=sflag, size = 0x8, scoped, tag = 'scoped memory for decoding_layer_forward.1']
    #allocation6 [shape = 'u8[8192]{0}', space=vmem, size = 0x2000, scoped, tag = 'input window, operand 2']
    #allocation7 [shape = 's32[2]{0}', space=sflag, size = 0x8, scoped, tag = 'scoped memory for decoding_layer_forward.1']
    #allocation8 [shape = 'u8[1048576]{0}', space=vmem, size = 0x100000, scoped, tag = 'input window, operand 3, single buffered']
    #allocation9 [shape = 'u8[4096]{0}', space=vmem, size = 0x1000, scoped, tag = 'input window, operand 4, single buffered']
    #allocation10 [shape = 's32[1]{0}', space=sflag, size = 0x4, scoped, tag = 'scoped memory for decoding_layer_forward.1']
    %10 = vsyncpa [#allocation5], 0
    %s11 = scalar_lea.sflag [#allocation5], 1
    %12 = vsyncpa %s11, 0
    %13 = vsyncpa [#allocation7], 0
    %s14 = scalar_lea.sflag [#allocation7], 1
    %15 = vsyncpa %s14, 0
    %16 = vsyncpa [#allocation10], 0
    loop: start=0, step=1, limit=7
    $region2: #{decoding_layer_forward.1} parent=1 // loop_pre_header
      _
    $region3: #{decoding_layer_forward.1} parent=1 // loop_header
      %s18 = sphi 0, %s22
      %p19 = scmp.ge.s32.totalorder %s18, 7
      %s26 = sphi 0, %s26
      %s28 = sphi 0, %s26
      %s29 = sphi 0, %s28
      %s43 = sphi 0, %s29
      %s49 = sphi 0, %s51
      %s52 = sphi 0, %s49
      %s53 = sphi 0, %s52
      %s69 = sphi 0, %s53
      %s75 = sphi 0, %s77
      %s78 = sphi 0, %s75
      %s79 = sphi 0, %s78
      %s95 = sphi 0, %s79
      %s99 = sphi 0, %s99
      %s101 = sphi 0, %s99
      %s102 = sphi 0, %s101
      %s116 = sphi 0, %s102
      %s120 = sphi 0, %s120
      %s122 = sphi 0, %s120
      %s123 = sphi 0, %s122
      %s137 = sphi 0, %s123
      %s141 = sphi 0, %s141
      %s143 = sphi 0, %s141
      %s144 = sphi 0, %s143
      %s158 = sphi 0, %s144
    $region4: #{decoding_layer_forward.1} parent=1 // loop_header_branch
      %21 = sbr.rel (%p19) target = $region8
    $region5: #{decoding_layer_forward.1} parent=1 // loop_body
      %s23 = ssub.s32 %s18, 1
      %s24 = ssub.s32 %s18, 2
      %s25 = sadd.s32 %s18, 1
      %s27 = sadd.s32 %s26, 1
      %p30 = scmp.eq.s32.totalorder %s18, 4
      %p31 = scmp.ne.s32.totalorder %s26, %s28
      %p32 = scmp.eq.s32.totalorder %s18, 0
      %p33 = por %p31, %p32
      %p34 = scmp.ne.s32.totalorder %s26, %s28
      %p35 = scmp.eq.s32.totalorder %s23, 4
      %p36 = por %p34, %p35
      %p37 = scmp.ne.s32.totalorder %s28, %s29
      %p38 = scmp.eq.s32.totalorder %s23, 0
      %p39 = por %p37, %p38
      %p40 = scmp.ne.s32.totalorder %s28, %s29
      %p41 = scmp.eq.s32.totalorder %s24, 4
      %p42 = por %p40, %p41
      %p44 = scmp.ne.s32.totalorder %s29, %s43
      %p45 = scmp.eq.s32.totalorder %s24, 0
      %p46 = por %p44, %p45
      %s47 = ssub.s32 %s18, %s25
      %p48 = scmp.eq.s32.totalorder %s47, 0
      %s50 = sadd.s32 %s49, 1
      %s51 = scalar_select %p48, %s49, %s50
      %p54 = pneg %p48
      %p55 = scmp.eq.s32.totalorder %s18, 4
      %p56 = por %p54, %p55
      %p57 = scmp.ne.s32.totalorder %s49, %s52
      %p58 = scmp.eq.s32.totalorder %s18, 0
      %p59 = por %p57, %p58
      %p60 = scmp.ne.s32.totalorder %s49, %s52
      %p61 = scmp.eq.s32.totalorder %s23, 4
      %p62 = por %p60, %p61
      %p63 = scmp.ne.s32.totalorder %s52, %s53
      %p64 = scmp.eq.s32.totalorder %s23, 0
      %p65 = por %p63, %p64
      %p66 = scmp.ne.s32.totalorder %s52, %s53
      %p67 = scmp.eq.s32.totalorder %s24, 4
      %p68 = por %p66, %p67
      %p70 = scmp.ne.s32.totalorder %s53, %s69
      %p71 = scmp.eq.s32.totalorder %s24, 0
      %p72 = por %p70, %p71
      %s73 = ssub.s32 %s18, %s25
      %p74 = scmp.eq.s32.totalorder %s73, 0
      %s76 = sadd.s32 %s75, 1
      %s77 = scalar_select %p74, %s75, %s76
      %p80 = pneg %p74
      %p81 = scmp.eq.s32.totalorder %s18, 4
      %p82 = por %p80, %p81
      %p83 = scmp.ne.s32.totalorder %s75, %s78
      %p84 = scmp.eq.s32.totalorder %s18, 0
      %p85 = por %p83, %p84
      %p86 = scmp.ne.s32.totalorder %s75, %s78
      %p87 = scmp.eq.s32.totalorder %s23, 4
      %p88 = por %p86, %p87
      %p89 = scmp.ne.s32.totalorder %s78, %s79
      %p90 = scmp.eq.s32.totalorder %s23, 0
      %p91 = por %p89, %p90
      %p92 = scmp.ne.s32.totalorder %s78, %s79
      %p93 = scmp.eq.s32.totalorder %s24, 4
      %p94 = por %p92, %p93
      %p96 = scmp.ne.s32.totalorder %s79, %s95
      %p97 = scmp.eq.s32.totalorder %s24, 0
      %p98 = por %p96, %p97
      %s100 = sadd.s32 %s99, 1
      %p103 = scmp.eq.s32.totalorder %s18, 4
      %p104 = scmp.ne.s32.totalorder %s99, %s101
      %p105 = scmp.eq.s32.totalorder %s18, 0
      %p106 = por %p104, %p105
      %p107 = scmp.ne.s32.totalorder %s99, %s101
      %p108 = scmp.eq.s32.totalorder %s23, 4
      %p109 = por %p107, %p108
      %p110 = scmp.ne.s32.totalorder %s101, %s102
      %p111 = scmp.eq.s32.totalorder %s23, 0
      %p112 = por %p110, %p111
      %p113 = scmp.ne.s32.totalorder %s101, %s102
      %p114 = scmp.eq.s32.totalorder %s24, 4
      %p115 = por %p113, %p114
      %p117 = scmp.ne.s32.totalorder %s102, %s116
      %p118 = scmp.eq.s32.totalorder %s24, 0
      %p119 = por %p117, %p118
      %s121 = sadd.s32 %s120, 1
      %p124 = scmp.eq.s32.totalorder %s18, 4
      %p125 = scmp.ne.s32.totalorder %s120, %s122
      %p126 = scmp.eq.s32.totalorder %s18, 0
      %p127 = por %p125, %p126
      %p128 = scmp.ne.s32.totalorder %s120, %s122
      %p129 = scmp.eq.s32.totalorder %s23, 4
      %p130 = por %p128, %p129
      %p131 = scmp.ne.s32.totalorder %s122, %s123
      %p132 = scmp.eq.s32.totalorder %s23, 0
      %p133 = por %p131, %p132
      %p134 = scmp.ne.s32.totalorder %s122, %s123
      %p135 = scmp.eq.s32.totalorder %s24, 4
      %p136 = por %p134, %p135
      %p138 = scmp.ne.s32.totalorder %s123, %s137
      %p139 = scmp.eq.s32.totalorder %s24, 0
      %p140 = por %p138, %p139
      %s142 = sadd.s32 %s141, 1
      %p145 = scmp.eq.s32.totalorder %s18, 4
      %p146 = scmp.ne.s32.totalorder %s141, %s143
      %p147 = scmp.eq.s32.totalorder %s18, 0
      %p148 = por %p146, %p147
      %p149 = scmp.ne.s32.totalorder %s141, %s143
      %p150 = scmp.eq.s32.totalorder %s23, 4
      %p151 = por %p149, %p150
      %p152 = scmp.ne.s32.totalorder %s143, %s144
      %p153 = scmp.eq.s32.totalorder %s23, 0
      %p154 = por %p152, %p153
      %p155 = scmp.ne.s32.totalorder %s143, %s144
      %p156 = scmp.eq.s32.totalorder %s24, 4
      %p157 = por %p155, %p156
      %p159 = scmp.ne.s32.totalorder %s144, %s158
      %p160 = scmp.eq.s32.totalorder %s24, 0
      %p161 = por %p159, %p160
      %p162 = scmp.le.s32.totalorder 1, %s18
      %p163 = scmp.lt.s32.totalorder %s18, 6
      %p164 = pnand %p162, %p163
      %p165 = pneg %p164
      // Predicated region
      $region9: #{decoding_layer_forward.1} parent=5 // pred_check
        _
      $region10: #{decoding_layer_forward.1} parent=5 // pred_check_branch
        %167 = sbr.rel (%p164) target = $region12
      $region11: #{decoding_layer_forward.1} parent=5 // pred_region
        %s168 = ssub.s32 %s18, 1
        // Predicated region
        $region13: #{decoding_layer_forward.1} parent=11 // pred_check
          %p169 = pneg %p39
        $region14: #{decoding_layer_forward.1} parent=11 // pred_check_branch
          %171 = sbr.rel (%p169) target = $region16
        $region15: #{decoding_layer_forward.1} parent=11 // pred_region
          _
        $region16: #{decoding_layer_forward.1} parent=11 // pred_fallthru
          _
        // Predicated region
        $region17: #{decoding_layer_forward.1} parent=11 // pred_check
          %p172 = pneg %p112
        $region18: #{decoding_layer_forward.1} parent=11 // pred_check_branch
          %174 = sbr.rel (%p172) target = $region20
        $region19: #{decoding_layer_forward.1} parent=11 // pred_region
          %s176 = ssub.s32 32768, 32768
          %177 = vsyncadd [#allocation7], %s176
          %s178 = sshll.u32 [#allocation8], 4
          %s179 = int_to_ptr.vmem [resolvable:$true] %s178
          %184 = dma.hbm_to_vmem [thread:$0]  %s3, 32768, %s179, [#allocation7], 1024, 1024, 64
        $region20: #{decoding_layer_forward.1} parent=11 // pred_fallthru
          _
        // Predicated region
        $region21: #{decoding_layer_forward.1} parent=11 // pred_check
          %p185 = pneg %p133
        $region22: #{decoding_layer_forward.1} parent=11 // pred_check_branch
          %187 = sbr.rel (%p185) target = $region24
        $region23: #{decoding_layer_forward.1} parent=11 // pred_region
          %s189 = ssub.s32 128, 128
          %190 = vsyncadd [#allocation10], %s189
          %s192 = sshll.u32 [#allocation9], 4
          %s193 = int_to_ptr.vmem [resolvable:$true] %s192
          %195 = dma.hbm_to_vmem [thread:$0]  %s4, 128, %s193, [#allocation10]
        $region24: #{decoding_layer_forward.1} parent=11 // pred_fallthru
          _
      $region12: #{decoding_layer_forward.1} parent=5 // pred_fallthru
        _
      %p196 = scmp.lt.s32.totalorder %s18, 5
      // Predicated region
      $region25: #{decoding_layer_forward.1} parent=5 // pred_check
        %p197 = pneg %p196
      $region26: #{decoding_layer_forward.1} parent=5 // pred_check_branch
        %199 = sbr.rel (%p197) target = $region28
      $region27: #{decoding_layer_forward.1} parent=5 // pred_region
        // Predicated region
        $region29: #{decoding_layer_forward.1} parent=27 // pred_check
          %p200 = pneg %p59
        $region30: #{decoding_layer_forward.1} parent=27 // pred_check_branch
          %202 = sbr.rel (%p200) target = $region32
        $region31: #{decoding_layer_forward.1} parent=27 // pred_region
          %s203 = sand.u32 %s49, 1
          %s204 = scalar_lea.sflag [#allocation5], %s203
          %s205 = sand.u32 %s49, 1
          %s206 = smul.addr %s205, 1536
          %s207 = scalar_lea.vmem [#allocation4], %s206
          %s209 = ssub.s32 24576, 24576
          %210 = vsyncadd %s204, %s209
          %s211 = smul.addr %s18, 192
          %s212 = smul.addr %s211, 128
          %s213 = scalar_lea.hbm %s1, %s212
          %s214 = sshll.u32 %s207, 4
          %s215 = int_to_ptr.vmem [resolvable:$true] %s214
          %220 = dma.hbm_to_vmem [thread:$0]  %s213, 24576, %s215, %s204, 256, 256, 16
        $region32: #{decoding_layer_forward.1} parent=27 // pred_fallthru
          _
        // Predicated region
        $region33: #{decoding_layer_forward.1} parent=27 // pred_check
          %p221 = pneg %p85
        $region34: #{decoding_layer_forward.1} parent=27 // pred_check_branch
          %223 = sbr.rel (%p221) target = $region36
        $region35: #{decoding_layer_forward.1} parent=27 // pred_region
          %s224 = sand.u32 %s18, 1
          %s225 = scalar_lea.sflag [#allocation7], %s224
          %s226 = sand.u32 %s75, 1
          %s227 = smul.addr %s226, 8
          %s228 = scalar_lea.vmem [#allocation6], %s227
          %s230 = ssub.s32 128, 128
          %231 = vsyncadd %s225, %s230
          %s232 = smul.addr %s18, 2
          %s233 = smul.addr %s232, 64
          %s234 = scalar_lea.hbm %s2, %s233
          %s236 = sshll.u32 %s228, 4
          %s237 = int_to_ptr.vmem [resolvable:$true] %s236
          %239 = dma.hbm_to_vmem [thread:$0]  %s234, 128, %s237, %s225
        $region36: #{decoding_layer_forward.1} parent=27 // pred_fallthru
          _
      $region28: #{decoding_layer_forward.1} parent=5 // pred_fallthru
        _
      %p240 = scmp.le.s32.totalorder 1, %s18
      %p241 = scmp.lt.s32.totalorder %s18, 6
      %p242 = pnand %p240, %p241
      %p243 = pneg %p242
      // Predicated region
      $region37: #{decoding_layer_forward.1} parent=5 // pred_check
        _
      $region38: #{decoding_layer_forward.1} parent=5 // pred_check_branch
        %245 = sbr.rel (%p242) target = $region40
      $region39: #{decoding_layer_forward.1} parent=5 // pred_region
        %s246 = ssub.s32 %s18, 1
        %s247 = sand.u32 %s52, 1
        %s248 = scalar_lea.sflag [#allocation5], %s247
        %s249 = sand.u32 %s52, 1
        %s250 = smul.addr %s249, 1536
        %s251 = scalar_lea.vmem [#allocation4], %s250
        // Predicated region
        $region41: #{decoding_layer_forward.1} parent=39 // pred_check
          %p252 = pneg %p65
        $region42: #{decoding_layer_forward.1} parent=39 // pred_check_branch
          %254 = sbr.rel (%p252) target = $region44
        $region43: #{decoding_layer_forward.1} parent=39 // pred_region
          %255 = dma.done %s248, 24576
        $region44: #{decoding_layer_forward.1} parent=39 // pred_fallthru
          _
        %s256 = sand.u32 %s23, 1
        %s257 = scalar_lea.sflag [#allocation7], %s256
        %s258 = sand.u32 %s78, 1
        %s259 = smul.addr %s258, 8
        %s260 = scalar_lea.vmem [#allocation6], %s259
        // Predicated region
        $region45: #{decoding_layer_forward.1} parent=39 // pred_check
          %p261 = pneg %p91
        $region46: #{decoding_layer_forward.1} parent=39 // pred_check_branch
          %263 = sbr.rel (%p261) target = $region48
        $region47: #{decoding_layer_forward.1} parent=39 // pred_region
          %264 = dma.done %s257, 128
        $region48: #{decoding_layer_forward.1} parent=39 // pred_fallthru
          _
        // Predicated region
        $region49: #{decoding_layer_forward.1} parent=39 // pred_check
          %p265 = pneg %p112
        $region50: #{decoding_layer_forward.1} parent=39 // pred_check_branch
          %267 = sbr.rel (%p265) target = $region52
        $region51: #{decoding_layer_forward.1} parent=39 // pred_region
          %268 = dma.done [#allocation7], 32768
        $region52: #{decoding_layer_forward.1} parent=39 // pred_fallthru
          _
        // Predicated region
        $region53: #{decoding_layer_forward.1} parent=39 // pred_check
          %p269 = pneg %p133
        $region54: #{decoding_layer_forward.1} parent=39 // pred_check_branch
          %271 = sbr.rel (%p269) target = $region56
        $region55: #{decoding_layer_forward.1} parent=39 // pred_region
          %272 = dma.done [#allocation10], 128
        $region56: #{decoding_layer_forward.1} parent=39 // pred_fallthru
          _
        %p273 = pneg %p39
        %p274 = pneg %p36
        %s275 = sand.u32 %s52, 1
        %s276 = scalar_lea.sflag [#allocation5], %s275
        %s277 = sand.u32 %s52, 1
        %s278 = smul.addr %s277, 1536
        %s279 = scalar_lea.vmem [#allocation4], %s278
        %p280 = pneg %p65
        %p281 = pneg %p62
        %s282 = sand.u32 %s23, 1
        %s283 = scalar_lea.sflag [#allocation7], %s282
        %s284 = sand.u32 %s78, 1
        %s285 = smul.addr %s284, 8
        %s286 = scalar_lea.vmem [#allocation6], %s285
        %p287 = pneg %p91
        %p288 = pneg %p88
        %p289 = pneg %p112
        %p290 = pneg %p109
        %p291 = pneg %p133
        %p292 = pneg %p130
        %p293 = pneg %p154
        %p294 = pneg %p151
        %p295 = scmp.eq.s32.totalorder %s23, 0
        // Predicated region
        $region57: #{decoding_layer_forward.1} parent=39 // pred_check
          %p296 = pneg %p295
        $region58: #{decoding_layer_forward.1} parent=39 // pred_check_branch
          %298 = sbr.rel (%p296) target = $region60
        $region59: #{decoding_layer_forward.1} parent=39 // pred_region
          %v299 = vld [vmem:[%s0] sm:$0xff]
          %v300 = vld [vmem:[%s0 + $0x8] sm:$0xff]
          %v301 = vld [vmem:[%s0 + $0x10] sm:$0xff]
          %v302 = vld [vmem:[%s0 + $0x18] sm:$0xff]
          %303 = vst [vmem:[#allocation2] sm:$0xff] %v299
          %304 = vst [vmem:[#allocation2 + $0x8] sm:$0xff] %v300
          %305 = vst [vmem:[#allocation2 + $0x10] sm:$0xff] %v301
          %306 = vst [vmem:[#allocation2 + $0x18] sm:$0xff] %v302
          %307 = vst [vmem:[#allocation3] sm:$0xff] 0.0
          %308 = vst [vmem:[#allocation3 + $0x8] sm:$0xff] 0.0
          %309 = vst [vmem:[#allocation3 + $0x10] sm:$0xff] 0.0
          %310 = vst [vmem:[#allocation3 + $0x18] sm:$0xff] 0.0
        $region60: #{decoding_layer_forward.1} parent=39 // pred_fallthru
          _
        %v311 = vld [vmem:[#allocation2] sm:$0xff]
        %v312 = vld [vmem:[#allocation2 + $0x8] sm:$0xff]
        %v313 = vld [vmem:[#allocation2 + $0x10] sm:$0xff]
        %v314 = vld [vmem:[#allocation2 + $0x18] sm:$0xff]
        %v317 = vrot.slane %v311, 7
        %v318 = vrot.slane %v312, 7
        %vm321 = vcmask 1040384
        %v322 = vsel %vm321, %v311, %v317
        %v323 = vsel %vm321, %v312, %v318
        %v324 = vrot.slane %v311, 1
        %v325 = vrot.slane %v312, 1
        %vm328 = vcmask 1046528
        %v329 = vsel %vm328, %v324, %v311
        %v330 = vsel %vm328, %v325, %v312
        %v333 = vrot.slane %v313, 7
        %v334 = vrot.slane %v314, 7
        %v337 = vsel %vm321, %v313, %v333
        %v338 = vsel %vm321, %v314, %v334
        %v339 = vrot.slane %v313, 1
        %v340 = vrot.slane %v314, 1
        %v343 = vsel %vm328, %v339, %v313
        %v344 = vsel %vm328, %v340, %v314
        %v345 = vld [vmem:[%s260] sm:$0x77]
        %v346 = vld [vmem:[%s251] sm:$0xff]
        %v347 = vld [vmem:[%s251 + $0x8] sm:$0xff]
        %v348 = vld [vmem:[%s251 + $0x10] sm:$0xff]
        %v349 = vld [vmem:[%s251 + $0x18] sm:$0xff]
        %v350 = vld [vmem:[%s251 + $0x20] sm:$0xff]
        %v351 = vld [vmem:[%s251 + $0x28] sm:$0xff]
        %v352 = vld [vmem:[%s251 + $0x30] sm:$0xff]
        %v353 = vld [vmem:[%s251 + $0x38] sm:$0xff]
        %v354 = vld [vmem:[%s251 + $0x40] sm:$0xff]
        %v355 = vld [vmem:[%s251 + $0x48] sm:$0xff]
        %v356 = vld [vmem:[%s251 + $0x50] sm:$0xff]
        %v357 = vld [vmem:[%s251 + $0x58] sm:$0xff]
        %v358 = vld [vmem:[%s251 + $0x60] sm:$0xff]
        %v359 = vld [vmem:[%s251 + $0x68] sm:$0xff]
        %v360 = vld [vmem:[%s251 + $0x70] sm:$0xff]
        %v361 = vld [vmem:[%s251 + $0x78] sm:$0xff]
        %v362 = vld [vmem:[%s251 + $0x80] sm:$0xff]
        %v363 = vld [vmem:[%s251 + $0x88] sm:$0xff]
        %v364 = vld [vmem:[%s251 + $0x90] sm:$0xff]
        %v365 = vld [vmem:[%s251 + $0x98] sm:$0xff]
        %v366 = vld [vmem:[%s251 + $0xa0] sm:$0xff]
        %v367 = vld [vmem:[%s251 + $0xa8] sm:$0xff]
        %v368 = vld [vmem:[%s251 + $0xb0] sm:$0xff]
        %v369 = vld [vmem:[%s251 + $0xb8] sm:$0xff]
        %v370 = vld [vmem:[%s251 + $0xc0] sm:$0xff]
        %v371 = vld [vmem:[%s251 + $0xc8] sm:$0xff]
        %v372 = vld [vmem:[%s251 + $0xd0] sm:$0xff]
        %v373 = vld [vmem:[%s251 + $0xd8] sm:$0xff]
        %v374 = vld [vmem:[%s251 + $0xe0] sm:$0xff]
        %v375 = vld [vmem:[%s251 + $0xe8] sm:$0xff]
        %v376 = vld [vmem:[%s251 + $0xf0] sm:$0xff]
        %v377 = vld [vmem:[%s251 + $0xf8] sm:$0xff]
        %v378 = vld [vmem:[%s251 + $0x100] sm:$0xff]
        %v379 = vld [vmem:[%s251 + $0x108] sm:$0xff]
        %v380 = vld [vmem:[%s251 + $0x110] sm:$0xff]
        %v381 = vld [vmem:[%s251 + $0x118] sm:$0xff]
        %v382 = vld [vmem:[%s251 + $0x120] sm:$0xff]
        %v383 = vld [vmem:[%s251 + $0x128] sm:$0xff]
        %v384 = vld [vmem:[%s251 + $0x130] sm:$0xff]
        %v385 = vld [vmem:[%s251 + $0x138] sm:$0xff]
        %v386 = vld [vmem:[%s251 + $0x140] sm:$0xff]
        %v387 = vld [vmem:[%s251 + $0x148] sm:$0xff]
        %v388 = vld [vmem:[%s251 + $0x150] sm:$0xff]
        %v389 = vld [vmem:[%s251 + $0x158] sm:$0xff]
        %v390 = vld [vmem:[%s251 + $0x160] sm:$0xff]
        %v391 = vld [vmem:[%s251 + $0x168] sm:$0xff]
        %v392 = vld [vmem:[%s251 + $0x170] sm:$0xff]
        %v393 = vld [vmem:[%s251 + $0x178] sm:$0xff]
        %v394 = vld [vmem:[%s251 + $0x180] sm:$0xff]
        %v395 = vld [vmem:[%s251 + $0x188] sm:$0xff]
        %v396 = vld [vmem:[%s251 + $0x190] sm:$0xff]
        %v397 = vld [vmem:[%s251 + $0x198] sm:$0xff]
        %v398 = vld [vmem:[%s251 + $0x1a0] sm:$0xff]
        %v399 = vld [vmem:[%s251 + $0x1a8] sm:$0xff]
        %v400 = vld [vmem:[%s251 + $0x1b0] sm:$0xff]
        %v401 = vld [vmem:[%s251 + $0x1b8] sm:$0xff]
        %v402 = vld [vmem:[%s251 + $0x1c0] sm:$0xff]
        %v403 = vld [vmem:[%s251 + $0x1c8] sm:$0xff]
        %v404 = vld [vmem:[%s251 + $0x1d0] sm:$0xff]
        %v405 = vld [vmem:[%s251 + $0x1d8] sm:$0xff]
        %v406 = vld [vmem:[%s251 + $0x1e0] sm:$0xff]
        %v407 = vld [vmem:[%s251 + $0x1e8] sm:$0xff]
        %v408 = vld [vmem:[%s251 + $0x1f0] sm:$0xff]
        %v409 = vld [vmem:[%s251 + $0x1f8] sm:$0xff]
        %v410 = vld [vmem:[%s251 + $0x200] sm:$0xff]
        %v411 = vld [vmem:[%s251 + $0x208] sm:$0xff]
        %v412 = vld [vmem:[%s251 + $0x210] sm:$0xff]
        %v413 = vld [vmem:[%s251 + $0x218] sm:$0xff]
        %v414 = vld [vmem:[%s251 + $0x220] sm:$0xff]
        %v415 = vld [vmem:[%s251 + $0x228] sm:$0xff]
        %v416 = vld [vmem:[%s251 + $0x230] sm:$0xff]
        %v417 = vld [vmem:[%s251 + $0x238] sm:$0xff]
        %v418 = vld [vmem:[%s251 + $0x240] sm:$0xff]
        %v419 = vld [vmem:[%s251 + $0x248] sm:$0xff]
        %v420 = vld [vmem:[%s251 + $0x250] sm:$0xff]
        %v421 = vld [vmem:[%s251 + $0x258] sm:$0xff]
        %v422 = vld [vmem:[%s251 + $0x260] sm:$0xff]
        %v423 = vld [vmem:[%s251 + $0x268] sm:$0xff]
        %v424 = vld [vmem:[%s251 + $0x270] sm:$0xff]
        %v425 = vld [vmem:[%s251 + $0x278] sm:$0xff]
        %v426 = vld [vmem:[%s251 + $0x280] sm:$0xff]
        %v427 = vld [vmem:[%s251 + $0x288] sm:$0xff]
        %v428 = vld [vmem:[%s251 + $0x290] sm:$0xff]
        %v429 = vld [vmem:[%s251 + $0x298] sm:$0xff]
        %v430 = vld [vmem:[%s251 + $0x2a0] sm:$0xff]
        %v431 = vld [vmem:[%s251 + $0x2a8] sm:$0xff]
        %v432 = vld [vmem:[%s251 + $0x2b0] sm:$0xff]
        %v433 = vld [vmem:[%s251 + $0x2b8] sm:$0xff]
        %v434 = vld [vmem:[%s251 + $0x2c0] sm:$0xff]
        %v435 = vld [vmem:[%s251 + $0x2c8] sm:$0xff]
        %v436 = vld [vmem:[%s251 + $0x2d0] sm:$0xff]
        %v437 = vld [vmem:[%s251 + $0x2d8] sm:$0xff]
        %v438 = vld [vmem:[%s251 + $0x2e0] sm:$0xff]
        %v439 = vld [vmem:[%s251 + $0x2e8] sm:$0xff]
        %v440 = vld [vmem:[%s251 + $0x2f0] sm:$0xff]
        %v441 = vld [vmem:[%s251 + $0x2f8] sm:$0xff]
        %v442 = vld [vmem:[%s251 + $0x300] sm:$0xff]
        %v443 = vld [vmem:[%s251 + $0x308] sm:$0xff]
        %v444 = vld [vmem:[%s251 + $0x310] sm:$0xff]
        %v445 = vld [vmem:[%s251 + $0x318] sm:$0xff]
        %v446 = vld [vmem:[%s251 + $0x320] sm:$0xff]
        %v447 = vld [vmem:[%s251 + $0x328] sm:$0xff]
        %v448 = vld [vmem:[%s251 + $0x330] sm:$0xff]
        %v449 = vld [vmem:[%s251 + $0x338] sm:$0xff]
        %v450 = vld [vmem:[%s251 + $0x340] sm:$0xff]
        %v451 = vld [vmem:[%s251 + $0x348] sm:$0xff]
        %v452 = vld [vmem:[%s251 + $0x350] sm:$0xff]
        %v453 = vld [vmem:[%s251 + $0x358] sm:$0xff]
        %v454 = vld [vmem:[%s251 + $0x360] sm:$0xff]
        %v455 = vld [vmem:[%s251 + $0x368] sm:$0xff]
        %v456 = vld [vmem:[%s251 + $0x370] sm:$0xff]
        %v457 = vld [vmem:[%s251 + $0x378] sm:$0xff]
        %v458 = vld [vmem:[%s251 + $0x380] sm:$0xff]
        %v459 = vld [vmem:[%s251 + $0x388] sm:$0xff]
        %v460 = vld [vmem:[%s251 + $0x390] sm:$0xff]
        %v461 = vld [vmem:[%s251 + $0x398] sm:$0xff]
        %v462 = vld [vmem:[%s251 + $0x3a0] sm:$0xff]
        %v463 = vld [vmem:[%s251 + $0x3a8] sm:$0xff]
        %v464 = vld [vmem:[%s251 + $0x3b0] sm:$0xff]
        %v465 = vld [vmem:[%s251 + $0x3b8] sm:$0xff]
        %v466 = vld [vmem:[%s251 + $0x3c0] sm:$0xff]
        %v467 = vld [vmem:[%s251 + $0x3c8] sm:$0xff]
        %v468 = vld [vmem:[%s251 + $0x3d0] sm:$0xff]
        %v469 = vld [vmem:[%s251 + $0x3d8] sm:$0xff]
        %v470 = vld [vmem:[%s251 + $0x3e0] sm:$0xff]
        %v471 = vld [vmem:[%s251 + $0x3e8] sm:$0xff]
        %v472 = vld [vmem:[%s251 + $0x3f0] sm:$0xff]
        %v473 = vld [vmem:[%s251 + $0x3f8] sm:$0xff]
        %v474 = vld [vmem:[%s251 + $0x400] sm:$0xff]
        %v475 = vld [vmem:[%s251 + $0x408] sm:$0xff]
        %v476 = vld [vmem:[%s251 + $0x410] sm:$0xff]
        %v477 = vld [vmem:[%s251 + $0x418] sm:$0xff]
        %v478 = vld [vmem:[%s251 + $0x420] sm:$0xff]
        %v479 = vld [vmem:[%s251 + $0x428] sm:$0xff]
        %v480 = vld [vmem:[%s251 + $0x430] sm:$0xff]
        %v481 = vld [vmem:[%s251 + $0x438] sm:$0xff]
        %v482 = vld [vmem:[%s251 + $0x440] sm:$0xff]
        %v483 = vld [vmem:[%s251 + $0x448] sm:$0xff]
        %v484 = vld [vmem:[%s251 + $0x450] sm:$0xff]
        %v485 = vld [vmem:[%s251 + $0x458] sm:$0xff]
        %v486 = vld [vmem:[%s251 + $0x460] sm:$0xff]
        %v487 = vld [vmem:[%s251 + $0x468] sm:$0xff]
        %v488 = vld [vmem:[%s251 + $0x470] sm:$0xff]
        %v489 = vld [vmem:[%s251 + $0x478] sm:$0xff]
        %v490 = vld [vmem:[%s251 + $0x480] sm:$0xff]
        %v491 = vld [vmem:[%s251 + $0x488] sm:$0xff]
        %v492 = vld [vmem:[%s251 + $0x490] sm:$0xff]
        %v493 = vld [vmem:[%s251 + $0x498] sm:$0xff]
        %v494 = vld [vmem:[%s251 + $0x4a0] sm:$0xff]
        %v495 = vld [vmem:[%s251 + $0x4a8] sm:$0xff]
        %v496 = vld [vmem:[%s251 + $0x4b0] sm:$0xff]
        %v497 = vld [vmem:[%s251 + $0x4b8] sm:$0xff]
        %v498 = vld [vmem:[%s251 + $0x4c0] sm:$0xff]
        %v499 = vld [vmem:[%s251 + $0x4c8] sm:$0xff]
        %v500 = vld [vmem:[%s251 + $0x4d0] sm:$0xff]
        %v501 = vld [vmem:[%s251 + $0x4d8] sm:$0xff]
        %v502 = vld [vmem:[%s251 + $0x4e0] sm:$0xff]
        %v503 = vld [vmem:[%s251 + $0x4e8] sm:$0xff]
        %v504 = vld [vmem:[%s251 + $0x4f0] sm:$0xff]
        %v505 = vld [vmem:[%s251 + $0x4f8] sm:$0xff]
        %v506 = vld [vmem:[%s251 + $0x500] sm:$0xff]
        %v507 = vld [vmem:[%s251 + $0x508] sm:$0xff]
        %v508 = vld [vmem:[%s251 + $0x510] sm:$0xff]
        %v509 = vld [vmem:[%s251 + $0x518] sm:$0xff]
        %v510 = vld [vmem:[%s251 + $0x520] sm:$0xff]
        %v511 = vld [vmem:[%s251 + $0x528] sm:$0xff]
        %v512 = vld [vmem:[%s251 + $0x530] sm:$0xff]
        %v513 = vld [vmem:[%s251 + $0x538] sm:$0xff]
        %v514 = vld [vmem:[%s251 + $0x540] sm:$0xff]
        %v515 = vld [vmem:[%s251 + $0x548] sm:$0xff]
        %v516 = vld [vmem:[%s251 + $0x550] sm:$0xff]
        %v517 = vld [vmem:[%s251 + $0x558] sm:$0xff]
        %v518 = vld [vmem:[%s251 + $0x560] sm:$0xff]
        %v519 = vld [vmem:[%s251 + $0x568] sm:$0xff]
        %v520 = vld [vmem:[%s251 + $0x570] sm:$0xff]
        %v521 = vld [vmem:[%s251 + $0x578] sm:$0xff]
        %v522 = vld [vmem:[%s251 + $0x580] sm:$0xff]
        %v523 = vld [vmem:[%s251 + $0x588] sm:$0xff]
        %v524 = vld [vmem:[%s251 + $0x590] sm:$0xff]
        %v525 = vld [vmem:[%s251 + $0x598] sm:$0xff]
        %v526 = vld [vmem:[%s251 + $0x5a0] sm:$0xff]
        %v527 = vld [vmem:[%s251 + $0x5a8] sm:$0xff]
        %v528 = vld [vmem:[%s251 + $0x5b0] sm:$0xff]
        %v529 = vld [vmem:[%s251 + $0x5b8] sm:$0xff]
        %v530 = vld [vmem:[%s251 + $0x5c0] sm:$0xff]
        %v531 = vld [vmem:[%s251 + $0x5c8] sm:$0xff]
        %v532 = vld [vmem:[%s251 + $0x5d0] sm:$0xff]
        %v533 = vld [vmem:[%s251 + $0x5d8] sm:$0xff]
        %v534 = vld [vmem:[%s251 + $0x5e0] sm:$0xff]
        %v535 = vld [vmem:[%s251 + $0x5e8] sm:$0xff]
        %v536 = vld [vmem:[%s251 + $0x5f0] sm:$0xff]
        %v537 = vld [vmem:[%s251 + $0x5f8] sm:$0xff]
        %v539 = vlaneseq
        %v540 = vshrl.u32 %v539, 7
        %v541 = vsub.s32 0, %v540
        %v542 = vrot.slane %v345, %v541
        %v543 = vlaneseq
        %v544 = vshrl.u32 %v543, 7
        %v545 = vsub.s32 4, %v544
        %v546 = vrot.slane %v345, %v545
        %v549 = vlaneseq
        %v550 = vshrl.u32 %v549, 7
        %v551 = vsub.s32 0, %v550
        %v552 = vrot.slane %v542, %v551
        %v553 = vlaneseq
        %v554 = vshrl.u32 %v553, 7
        %v555 = vsub.s32 0, %v554
        %v556 = vrot.slane %v546, %v555
        %557 = vmatprep.subr.mxu0 %v347
        %558 = vmatpush1.msra.mxu0 %v346
        %559 = vmatprep.subr.mxu0 %v349
        %560 = vmatpush1.msra.mxu0 %v348
        %561 = vmatprep.subr.mxu0 %v351
        %562 = vmatpush1.msra.mxu0 %v350
        %563 = vmatprep.subr.mxu0 %v353
        %564 = vmatpush1.msra.mxu0 %v352
        %565 = vmatprep.subr.mxu0 %v355
        %566 = vmatpush1.msra.mxu0 %v354
        %567 = vmatprep.subr.mxu0 %v357
        %568 = vmatpush1.msra.mxu0 %v356
        %569 = vmatprep.subr.mxu0 %v359
        %570 = vmatpush1.msra.mxu0 %v358
        %571 = vmatprep.subr.mxu0 %v361
        %572 = vmatpush1.msra.mxu0 %v360
        %573 = vmatprep.subr.mxu0 %v363
        %574 = vmatpush1.msra.mxu0 %v362
        %575 = vmatprep.subr.mxu0 %v365
        %576 = vmatpush1.msra.mxu0 %v364
        %577 = vmatprep.subr.mxu0 %v367
        %578 = vmatpush1.msra.mxu0 %v366
        %579 = vmatprep.subr.mxu0 %v369
        %580 = vmatpush1.msra.mxu0 %v368
        %581 = vmatprep.subr.mxu0 %v371
        %582 = vmatpush1.msra.mxu0 %v370
        %583 = vmatprep.subr.mxu0 %v373
        %584 = vmatpush1.msra.mxu0 %v372
        %585 = vmatprep.subr.mxu0 %v375
        %586 = vmatpush1.msra.mxu0 %v374
        %587 = vmatprep.subr.mxu0 %v377
        %588 = vmatpush1.msra.mxu0 %v376
        %589 = vmatprep.subr.mxu0 %v379
        %590 = vmatpush1.msra.mxu0 %v378
        %591 = vmatprep.subr.mxu0 %v381
        %592 = vmatpush1.msra.mxu0 %v380
        %593 = vmatprep.subr.mxu0 %v383
        %594 = vmatpush1.msra.mxu0 %v382
        %595 = vmatprep.subr.mxu0 %v385
        %596 = vmatpush1.msra.mxu0 %v384
        %597 = vmatprep.subr.mxu0 %v387
        %598 = vmatpush1.msra.mxu0 %v386
        %599 = vmatprep.subr.mxu0 %v389
        %600 = vmatpush1.msra.mxu0 %v388
        %601 = vmatprep.subr.mxu0 %v391
        %602 = vmatpush1.msra.mxu0 %v390
        %603 = vmatprep.subr.mxu0 %v393
        %604 = vmatpush1.msra.mxu0 %v392
        %605 = vmatprep.subr.mxu0 %v395
        %606 = vmatpush1.msra.mxu0 %v394
        %607 = vmatprep.subr.mxu0 %v397
        %608 = vmatpush1.msra.mxu0 %v396
        %609 = vmatprep.subr.mxu0 %v399
        %610 = vmatpush1.msra.mxu0 %v398
        %611 = vmatprep.subr.mxu0 %v401
        %612 = vmatpush1.msra.mxu0 %v400
        %613 = vmatprep.subr.mxu0 %v403
        %614 = vmatpush1.msra.mxu0 %v402
        %615 = vmatprep.subr.mxu0 %v405
        %616 = vmatpush1.msra.mxu0 %v404
        %617 = vmatprep.subr.mxu0 %v407
        %618 = vmatpush1.msra.mxu0 %v406
        %619 = vmatprep.subr.mxu0 %v409
        %620 = vmatpush1.msra.mxu0 %v408
        %621 = vmatprep.mubr.f32.mxu0 %v323
        %622 = vmatmul.mubr.f32.gmra.mrb[0].mxu0 %v322
        %v623 = vpop.f32.mrb[0].mxu0
        %v624 = vadd.f32 %v552, %v623
        %v625 = vpop.f32.mrb[0].mxu0
        %v626 = vadd.f32 %v556, %v625
        %627 = vmatprep.mubr.f32.mxu0 %v338
        %628 = vmatmul.mubr.f32.gmra.mrb[0].mxu0 %v337
        %v629 = vpop.f32.mrb[0].mxu0
        %v630 = vadd.f32 %v552, %v629
        %v631 = vpop.f32.mrb[0].mxu0
        %v632 = vadd.f32 %v556, %v631
        %633 = vdwg.mxu0
        %634 = vmatprep.subr.mxu0 %v411
        %635 = vmatpush1.msra.mxu0 %v410
        %636 = vmatprep.subr.mxu0 %v413
        %637 = vmatpush1.msra.mxu0 %v412
        %638 = vmatprep.subr.mxu0 %v415
        %639 = vmatpush1.msra.mxu0 %v414
        %640 = vmatprep.subr.mxu0 %v417
        %641 = vmatpush1.msra.mxu0 %v416
        %642 = vmatprep.subr.mxu0 %v419
        %643 = vmatpush1.msra.mxu0 %v418
        %644 = vmatprep.subr.mxu0 %v421
        %645 = vmatpush1.msra.mxu0 %v420
        %646 = vmatprep.subr.mxu0 %v423
        %647 = vmatpush1.msra.mxu0 %v422
        %648 = vmatprep.subr.mxu0 %v425
        %649 = vmatpush1.msra.mxu0 %v424
        %650 = vmatprep.subr.mxu0 %v427
        %651 = vmatpush1.msra.mxu0 %v426
        %652 = vmatprep.subr.mxu0 %v429
        %653 = vmatpush1.msra.mxu0 %v428
        %654 = vmatprep.subr.mxu0 %v431
        %655 = vmatpush1.msra.mxu0 %v430
        %656 = vmatprep.subr.mxu0 %v433
        %657 = vmatpush1.msra.mxu0 %v432
        %658 = vmatprep.subr.mxu0 %v435
        %659 = vmatpush1.msra.mxu0 %v434
        %660 = vmatprep.subr.mxu0 %v437
        %661 = vmatpush1.msra.mxu0 %v436
        %662 = vmatprep.subr.mxu0 %v439
        %663 = vmatpush1.msra.mxu0 %v438
        %664 = vmatprep.subr.mxu0 %v441
        %665 = vmatpush1.msra.mxu0 %v440
        %666 = vmatprep.subr.mxu0 %v443
        %667 = vmatpush1.msra.mxu0 %v442
        %668 = vmatprep.subr.mxu0 %v445
        %669 = vmatpush1.msra.mxu0 %v444
        %670 = vmatprep.subr.mxu0 %v447
        %671 = vmatpush1.msra.mxu0 %v446
        %672 = vmatprep.subr.mxu0 %v449
        %673 = vmatpush1.msra.mxu0 %v448
        %674 = vmatprep.subr.mxu0 %v451
        %675 = vmatpush1.msra.mxu0 %v450
        %676 = vmatprep.subr.mxu0 %v453
        %677 = vmatpush1.msra.mxu0 %v452
        %678 = vmatprep.subr.mxu0 %v455
        %679 = vmatpush1.msra.mxu0 %v454
        %680 = vmatprep.subr.mxu0 %v457
        %681 = vmatpush1.msra.mxu0 %v456
        %682 = vmatprep.subr.mxu0 %v459
        %683 = vmatpush1.msra.mxu0 %v458
        %684 = vmatprep.subr.mxu0 %v461
        %685 = vmatpush1.msra.mxu0 %v460
        %686 = vmatprep.subr.mxu0 %v463
        %687 = vmatpush1.msra.mxu0 %v462
        %688 = vmatprep.subr.mxu0 %v465
        %689 = vmatpush1.msra.mxu0 %v464
        %690 = vmatprep.subr.mxu0 %v467
        %691 = vmatpush1.msra.mxu0 %v466
        %692 = vmatprep.subr.mxu0 %v469
        %693 = vmatpush1.msra.mxu0 %v468
        %694 = vmatprep.subr.mxu0 %v471
        %695 = vmatpush1.msra.mxu0 %v470
        %696 = vmatprep.subr.mxu0 %v473
        %697 = vmatpush1.msra.mxu0 %v472
        %698 = vmatprep.mubr.f32.mxu0 %v312
        %699 = vmatmul.mubr.f32.gmra.mrb[0].mxu0 %v311
        %v700 = vpop.f32.mrb[0].mxu0
        %v701 = vadd.f32 %v624, %v700
        %v702 = vpop.f32.mrb[0].mxu0
        %v703 = vadd.f32 %v626, %v702
        %704 = vmatprep.mubr.f32.mxu0 %v314
        %705 = vmatmul.mubr.f32.gmra.mrb[0].mxu0 %v313
        %v706 = vpop.f32.mrb[0].mxu0
        %v707 = vadd.f32 %v630, %v706
        %v708 = vpop.f32.mrb[0].mxu0
        %v709 = vadd.f32 %v632, %v708
        %710 = vdwg.mxu0
        %711 = vmatprep.subr.mxu0 %v475
        %712 = vmatpush1.msra.mxu0 %v474
        %713 = vmatprep.subr.mxu0 %v477
        %714 = vmatpush1.msra.mxu0 %v476
        %715 = vmatprep.subr.mxu0 %v479
        %716 = vmatpush1.msra.mxu0 %v478
        %717 = vmatprep.subr.mxu0 %v481
        %718 = vmatpush1.msra.mxu0 %v480
        %719 = vmatprep.subr.mxu0 %v483
        %720 = vmatpush1.msra.mxu0 %v482
        %721 = vmatprep.subr.mxu0 %v485
        %722 = vmatpush1.msra.mxu0 %v484
        %723 = vmatprep.subr.mxu0 %v487
        %724 = vmatpush1.msra.mxu0 %v486
        %725 = vmatprep.subr.mxu0 %v489
        %726 = vmatpush1.msra.mxu0 %v488
        %727 = vmatprep.subr.mxu0 %v491
        %728 = vmatpush1.msra.mxu0 %v490
        %729 = vmatprep.subr.mxu0 %v493
        %730 = vmatpush1.msra.mxu0 %v492
        %731 = vmatprep.subr.mxu0 %v495
        %732 = vmatpush1.msra.mxu0 %v494
        %733 = vmatprep.subr.mxu0 %v497
        %734 = vmatpush1.msra.mxu0 %v496
        %735 = vmatprep.subr.mxu0 %v499
        %736 = vmatpush1.msra.mxu0 %v498
        %737 = vmatprep.subr.mxu0 %v501
        %738 = vmatpush1.msra.mxu0 %v500
        %739 = vmatprep.subr.mxu0 %v503
        %740 = vmatpush1.msra.mxu0 %v502
        %741 = vmatprep.subr.mxu0 %v505
        %742 = vmatpush1.msra.mxu0 %v504
        %743 = vmatprep.subr.mxu0 %v507
        %744 = vmatpush1.msra.mxu0 %v506
        %745 = vmatprep.subr.mxu0 %v509
        %746 = vmatpush1.msra.mxu0 %v508
        %747 = vmatprep.subr.mxu0 %v511
        %748 = vmatpush1.msra.mxu0 %v510
        %749 = vmatprep.subr.mxu0 %v513
        %750 = vmatpush1.msra.mxu0 %v512
        %751 = vmatprep.subr.mxu0 %v515
        %752 = vmatpush1.msra.mxu0 %v514
        %753 = vmatprep.subr.mxu0 %v517
        %754 = vmatpush1.msra.mxu0 %v516
        %755 = vmatprep.subr.mxu0 %v519
        %756 = vmatpush1.msra.mxu0 %v518
        %757 = vmatprep.subr.mxu0 %v521
        %758 = vmatpush1.msra.mxu0 %v520
        %759 = vmatprep.subr.mxu0 %v523
        %760 = vmatpush1.msra.mxu0 %v522
        %761 = vmatprep.subr.mxu0 %v525
        %762 = vmatpush1.msra.mxu0 %v524
        %763 = vmatprep.subr.mxu0 %v527
        %764 = vmatpush1.msra.mxu0 %v526
        %765 = vmatprep.subr.mxu0 %v529
        %766 = vmatpush1.msra.mxu0 %v528
        %767 = vmatprep.subr.mxu0 %v531
        %768 = vmatpush1.msra.mxu0 %v530
        %769 = vmatprep.subr.mxu0 %v533
        %770 = vmatpush1.msra.mxu0 %v532
        %771 = vmatprep.subr.mxu0 %v535
        %772 = vmatpush1.msra.mxu0 %v534
        %773 = vmatprep.subr.mxu0 %v537
        %774 = vmatpush1.msra.mxu0 %v536
        %775 = vmatprep.mubr.f32.mxu0 %v330
        %776 = vmatmul.mubr.f32.gmra.mrb[0].mxu0 %v329
        %v777 = vpop.f32.mrb[0].mxu0
        %v778 = vadd.f32 %v701, %v777
        %v779 = vpop.f32.mrb[0].mxu0
        %v780 = vadd.f32 %v703, %v779
        %781 = vmatprep.mubr.f32.mxu0 %v344
        %782 = vmatmul.mubr.f32.gmra.mrb[0].mxu0 %v343
        %v783 = vpop.f32.mrb[0].mxu0
        %v784 = vadd.f32 %v707, %v783
        %v785 = vpop.f32.mrb[0].mxu0
        %v786 = vadd.f32 %v709, %v785
        %787 = vdwg.mxu0
        %v788 = vmax.f32 %v778, 0.0
        %v789 = vmax.f32 %v780, 0.0
        %v790 = vmax.f32 %v784, 0.0
        %v791 = vmax.f32 %v786, 0.0
        %v792 = vadd.f32 %v788, %v790
        %v793 = vrot.slane %v792, 4
        %v794 = vadd.f32 %v792, %v793
        %v795 = vrot.slane %v794, 2
        %v796 = vadd.f32 %v794, %v795
        %v797 = vrot.slane %v796, 1
        %v798 = vadd.f32 %v796, %v797
        %v799 = vadd.f32 %v789, %v791
        %v800 = vrot.slane %v799, 4
        %v801 = vadd.f32 %v799, %v800
        %v802 = vrot.slane %v801, 2
        %v803 = vadd.f32 %v801, %v802
        %v804 = vrot.slane %v803, 1
        %v805 = vadd.f32 %v803, %v804
        %v806 = vmul.f32 %v788, %v788
        %v807 = vmul.f32 %v789, %v789
        %v808 = vmul.f32 %v790, %v790
        %v809 = vmul.f32 %v791, %v791
        %v810 = vadd.f32 %v806, %v808
        %v811 = vrot.slane %v810, 4
        %v812 = vadd.f32 %v810, %v811
        %v813 = vrot.slane %v812, 2
        %v814 = vadd.f32 %v812, %v813
        %v815 = vrot.slane %v814, 1
        %v816 = vadd.f32 %v814, %v815
        %v817 = vadd.f32 %v807, %v809
        %v818 = vrot.slane %v817, 4
        %v819 = vadd.f32 %v817, %v818
        %v820 = vrot.slane %v819, 2
        %v821 = vadd.f32 %v819, %v820
        %v822 = vrot.slane %v821, 1
        %v823 = vadd.f32 %v821, %v822
        %v824 = vsel %vm321, %v798, %v816
        %v825 = vsel %vm321, %v805, %v823
        %826 = vrot.lane.b32.xlu0 %v824, 4
        %v827 = vpop.permute.xlu0 %826
        %828 = vrot.lane.b32.xlu0 %v825, 4
        %v829 = vpop.permute.xlu0 %828
        %v830 = vlaneseq
        %v831 = vand.u32 %v830, 127
        %vm832 = vcmp.lt.s32.totalorder %v831, 4
        %v833 = vsel %vm832, %v827, %v829
        %v834 = vsel %vm832, %v829, %v827
        %v835 = vadd.f32 %v824, %v834
        %v836 = vadd.f32 %v825, %v833
        %837 = vrot.lane.b32.xlu0 %v835, 8
        %v838 = vpop.permute.xlu0 %837
        %839 = vrot.lane.b32.xlu0 %v836, 8
        %v840 = vpop.permute.xlu0 %839
        %vm841 = vcmp.lt.s32.totalorder %v831, 8
        %v842 = vsel %vm841, %v838, %v840
        %v843 = vsel %vm841, %v840, %v838
        %v844 = vadd.f32 %v835, %v843
        %v845 = vadd.f32 %v836, %v842
        %846 = vrot.lane.b32.xlu0 %v844, 16
        %v847 = vpop.permute.xlu0 %846
        %848 = vrot.lane.b32.xlu0 %v845, 16
        %v849 = vpop.permute.xlu0 %848
        %vm850 = vcmp.lt.s32.totalorder %v831, 16
        %v851 = vsel %vm850, %v847, %v849
        %v852 = vsel %vm850, %v849, %v847
        %v853 = vadd.f32 %v844, %v852
        %v854 = vadd.f32 %v845, %v851
        %855 = vrot.lane.b32.xlu0 %v853, 32
        %v856 = vpop.permute.xlu0 %855
        %857 = vrot.lane.b32.xlu0 %v854, 32
        %v858 = vpop.permute.xlu0 %857
        %vm859 = vcmp.lt.s32.totalorder %v831, 32
        %v860 = vsel %vm859, %v856, %v858
        %v861 = vsel %vm859, %v858, %v856
        %v862 = vadd.f32 %v853, %v861
        %v863 = vadd.f32 %v854, %v860
        %864 = vrot.lane.b32.xlu0 %v862, 64
        %v865 = vpop.permute.xlu0 %864
        %866 = vrot.lane.b32.xlu0 %v863, 64
        %v867 = vpop.permute.xlu0 %866
        %vm868 = vcmp.lt.s32.totalorder %v831, 64
        %v869 = vsel %vm868, %v865, %v867
        %v870 = vsel %vm868, %v867, %v865
        %v871 = vadd.f32 %v862, %v870
        %v872 = vadd.f32 %v863, %v869
        %v873 = vadd.f32 %v871, %v872
        %v874 = vmul.f32 %v873, 0.0009765625
        %v875 = vmul.f32 %v874, %v874
        %v877 = vrot.slane %v875, 7
        %v879 = vsub.f32 %v874, %v877
        %v880 = vmax.f32 %v879, 0.0
        %v881 = vadd.f32 %v880, 1e-05
        %v882 = vrsqrt.pop %v881
        %v884 = vcombine.low %v882, %v882
        %v886 = vmul.f32 %v345, %v884
        %v888 = vlaneseq
        %v889 = vshrl.u32 %v888, 7
        %v890 = vsub.s32 1, %v889
        %v891 = vrot.slane %v886, %v890
        %v892 = vlaneseq
        %v893 = vshrl.u32 %v892, 7
        %v894 = vsub.s32 5, %v893
        %v895 = vrot.slane %v886, %v894
        %v898 = vlaneseq
        %v899 = vshrl.u32 %v898, 7
        %v900 = vsub.s32 1, %v899
        %v901 = vrot.slane %v891, %v900
        %v902 = vlaneseq
        %v903 = vshrl.u32 %v902, 7
        %v904 = vsub.s32 1, %v903
        %v905 = vrot.slane %v895, %v904
        %v906 = vmul.f32 %v788, %v901
        %v907 = vmul.f32 %v789, %v905
        %v908 = vmul.f32 %v790, %v901
        %v909 = vmul.f32 %v791, %v905
        %v910 = vmul.f32 %v874, %v891
        %v911 = vmul.f32 %v874, %v895
        %v914 = vcombine.low %v910, %v911
        %v915 = vrot.slane %v914, 6
        %v917 = vsub.f32 %v345, %v915
        %v919 = vlaneseq
        %v920 = vshrl.u32 %v919, 7
        %v921 = vsub.s32 2, %v920
        %v922 = vrot.slane %v917, %v921
        %v923 = vlaneseq
        %v924 = vshrl.u32 %v923, 7
        %v925 = vsub.s32 6, %v924
        %v926 = vrot.slane %v917, %v925
        %v929 = vlaneseq
        %v930 = vshrl.u32 %v929, 7
        %v931 = vsub.s32 2, %v930
        %v932 = vrot.slane %v922, %v931
        %v933 = vlaneseq
        %v934 = vshrl.u32 %v933, 7
        %v935 = vsub.s32 2, %v934
        %v936 = vrot.slane %v926, %v935
        %v937 = vadd.f32 %v906, %v932
        %v938 = vadd.f32 %v907, %v936
        %v939 = vadd.f32 %v908, %v932
        %v940 = vadd.f32 %v909, %v936
        %p941 = scmp.eq.s32.totalorder %s23, 3
        %v942 = vld [vmem:[#allocation3] sm:$0xff]
        %v943 = vld [vmem:[#allocation3 + $0x8] sm:$0xff]
        %v944 = vld [vmem:[#allocation3 + $0x10] sm:$0xff]
        %v945 = vld [vmem:[#allocation3 + $0x18] sm:$0xff]
        %s946 = scalar_select %p941, 1, 0
        %v947 = vstv %s946
        %vm948 = vcmp.eq.s32.totalorder %v947, 1
        %v949 = vsel %vm948, %v942, 0.0
        %v950 = vsel %vm948, %v943, 0.0
        %v951 = vsel %vm948, %v944, 0.0
        %v952 = vsel %vm948, %v945, 0.0
        %v953 = vadd.f32 %v937, %v949
        %v954 = vadd.f32 %v938, %v950
        %v955 = vadd.f32 %v939, %v951
        %v956 = vadd.f32 %v940, %v952
        %957 = vst [vmem:[#allocation2] sm:$0xff] %v953
        %958 = vst [vmem:[#allocation2 + $0x8] sm:$0xff] %v954
        %959 = vst [vmem:[#allocation2 + $0x10] sm:$0xff] %v955
        %960 = vst [vmem:[#allocation2 + $0x18] sm:$0xff] %v956
        // Predicated region
        $region61: #{decoding_layer_forward.1} parent=39 // pred_check
          %p961 = pneg %p295
        $region62: #{decoding_layer_forward.1} parent=39 // pred_check_branch
          %963 = sbr.rel (%p961) target = $region64
        $region63: #{decoding_layer_forward.1} parent=39 // pred_region
          %964 = vst [vmem:[#allocation3] sm:$0xff] %v953
          %965 = vst [vmem:[#allocation3 + $0x8] sm:$0xff] %v954
          %966 = vst [vmem:[#allocation3 + $0x10] sm:$0xff] %v955
          %967 = vst [vmem:[#allocation3 + $0x18] sm:$0xff] %v956
        $region64: #{decoding_layer_forward.1} parent=39 // pred_fallthru
          _
        %p968 = scmp.eq.s32.totalorder %s23, 4
        // Predicated region
        $region65: #{decoding_layer_forward.1} parent=39 // pred_check
          %p969 = pneg %p968
        $region66: #{decoding_layer_forward.1} parent=39 // pred_check_branch
          %971 = sbr.rel (%p969) target = $region68
        $region67: #{decoding_layer_forward.1} parent=39 // pred_region
          %v972 = vld [vmem:[#allocation8] sm:$0xff]
          %v973 = vld [vmem:[#allocation8 + $0x8] sm:$0xff]
          %v974 = vld [vmem:[#allocation8 + $0x10] sm:$0xff]
          %v975 = vld [vmem:[#allocation8 + $0x18] sm:$0xff]
          %v976 = vld [vmem:[#allocation8 + $0x20] sm:$0xff]
          %v977 = vld [vmem:[#allocation8 + $0x28] sm:$0xff]
          %v978 = vld [vmem:[#allocation8 + $0x30] sm:$0xff]
          %v979 = vld [vmem:[#allocation8 + $0x38] sm:$0xff]
          %v980 = vld [vmem:[#allocation8 + $0x40] sm:$0xff]
          %v981 = vld [vmem:[#allocation8 + $0x48] sm:$0xff]
          %v982 = vld [vmem:[#allocation8 + $0x50] sm:$0xff]
          %v983 = vld [vmem:[#allocation8 + $0x58] sm:$0xff]
          %v984 = vld [vmem:[#allocation8 + $0x60] sm:$0xff]
          %v985 = vld [vmem:[#allocation8 + $0x68] sm:$0xff]
          %v986 = vld [vmem:[#allocation8 + $0x70] sm:$0xff]
          %v987 = vld [vmem:[#allocation8 + $0x78] sm:$0xff]
          %v988 = vld [vmem:[#allocation8 + $0x80] sm:$0xff]
          %v989 = vld [vmem:[#allocation8 + $0x88] sm:$0xff]
          %v990 = vld [vmem:[#allocation8 + $0x90] sm:$0xff]
          %v991 = vld [vmem:[#allocation8 + $0x98] sm:$0xff]
          %v992 = vld [vmem:[#allocation8 + $0xa0] sm:$0xff]
          %v993 = vld [vmem:[#allocation8 + $0xa8] sm:$0xff]
          %v994 = vld [vmem:[#allocation8 + $0xb0] sm:$0xff]
          %v995 = vld [vmem:[#allocation8 + $0xb8] sm:$0xff]
          %v996 = vld [vmem:[#allocation8 + $0xc0] sm:$0xff]
          %v997 = vld [vmem:[#allocation8 + $0xc8] sm:$0xff]
          %v998 = vld [vmem:[#allocation8 + $0xd0] sm:$0xff]
          %v999 = vld [vmem:[#allocation8 + $0xd8] sm:$0xff]
          %v1000 = vld [vmem:[#allocation8 + $0xe0] sm:$0xff]
          %v1001 = vld [vmem:[#allocation8 + $0xe8] sm:$0xff]
          %v1002 = vld [vmem:[#allocation8 + $0xf0] sm:$0xff]
          %v1003 = vld [vmem:[#allocation8 + $0xf8] sm:$0xff]
          %v1004 = vld [vmem:[#allocation8 + $0x100] sm:$0xff]
          %v1005 = vld [vmem:[#allocation8 + $0x108] sm:$0xff]
          %v1006 = vld [vmem:[#allocation8 + $0x110] sm:$0xff]
          %v1007 = vld [vmem:[#allocation8 + $0x118] sm:$0xff]
          %v1008 = vld [vmem:[#allocation8 + $0x120] sm:$0xff]
          %v1009 = vld [vmem:[#allocation8 + $0x128] sm:$0xff]
          %v1010 = vld [vmem:[#allocation8 + $0x130] sm:$0xff]
          %v1011 = vld [vmem:[#allocation8 + $0x138] sm:$0xff]
          %v1012 = vld [vmem:[#allocation8 + $0x140] sm:$0xff]
          %v1013 = vld [vmem:[#allocation8 + $0x148] sm:$0xff]
          %v1014 = vld [vmem:[#allocation8 + $0x150] sm:$0xff]
          %v1015 = vld [vmem:[#allocation8 + $0x158] sm:$0xff]
          %v1016 = vld [vmem:[#allocation8 + $0x160] sm:$0xff]
          %v1017 = vld [vmem:[#allocation8 + $0x168] sm:$0xff]
          %v1018 = vld [vmem:[#allocation8 + $0x170] sm:$0xff]
          %v1019 = vld [vmem:[#allocation8 + $0x178] sm:$0xff]
          %v1020 = vld [vmem:[#allocation8 + $0x180] sm:$0xff]
          %v1021 = vld [vmem:[#allocation8 + $0x188] sm:$0xff]
          %v1022 = vld [vmem:[#allocation8 + $0x190] sm:$0xff]
          %v1023 = vld [vmem:[#allocation8 + $0x198] sm:$0xff]
          %v1024 = vld [vmem:[#allocation8 + $0x1a0] sm:$0xff]
          %v1025 = vld [vmem:[#allocation8 + $0x1a8] sm:$0xff]
          %v1026 = vld [vmem:[#allocation8 + $0x1b0] sm:$0xff]
          %v1027 = vld [vmem:[#allocation8 + $0x1b8] sm:$0xff]
          %v1028 = vld [vmem:[#allocation8 + $0x1c0] sm:$0xff]
          %v1029 = vld [vmem:[#allocation8 + $0x1c8] sm:$0xff]
          %v1030 = vld [vmem:[#allocation8 + $0x1d0] sm:$0xff]
          %v1031 = vld [vmem:[#allocation8 + $0x1d8] sm:$0xff]
          %v1032 = vld [vmem:[#allocation8 + $0x1e0] sm:$0xff]
          %v1033 = vld [vmem:[#allocation8 + $0x1e8] sm:$0xff]
          %v1034 = vld [vmem:[#allocation8 + $0x1f0] sm:$0xff]
          %v1035 = vld [vmem:[#allocation8 + $0x1f8] sm:$0xff]
          %v1036 = vld [vmem:[#allocation8 + $0x200] sm:$0xff]
          %v1037 = vld [vmem:[#allocation8 + $0x208] sm:$0xff]
          %v1038 = vld [vmem:[#allocation8 + $0x210] sm:$0xff]
          %v1039 = vld [vmem:[#allocation8 + $0x218] sm:$0xff]
          %v1040 = vld [vmem:[#allocation8 + $0x220] sm:$0xff]
          %v1041 = vld [vmem:[#allocation8 + $0x228] sm:$0xff]
          %v1042 = vld [vmem:[#allocation8 + $0x230] sm:$0xff]
          %v1043 = vld [vmem:[#allocation8 + $0x238] sm:$0xff]
          %v1044 = vld [vmem:[#allocation8 + $0x240] sm:$0xff]
          %v1045 = vld [vmem:[#allocation8 + $0x248] sm:$0xff]
          %v1046 = vld [vmem:[#allocation8 + $0x250] sm:$0xff]
          %v1047 = vld [vmem:[#allocation8 + $0x258] sm:$0xff]
          %v1048 = vld [vmem:[#allocation8 + $0x260] sm:$0xff]
          %v1049 = vld [vmem:[#allocation8 + $0x268] sm:$0xff]
          %v1050 = vld [vmem:[#allocation8 + $0x270] sm:$0xff]
          %v1051 = vld [vmem:[#allocation8 + $0x278] sm:$0xff]
          %v1052 = vld [vmem:[#allocation8 + $0x280] sm:$0xff]
          %v1053 = vld [vmem:[#allocation8 + $0x288] sm:$0xff]
          %v1054 = vld [vmem:[#allocation8 + $0x290] sm:$0xff]
          %v1055 = vld [vmem:[#allocation8 + $0x298] sm:$0xff]
          %v1056 = vld [vmem:[#allocation8 + $0x2a0] sm:$0xff]
          %v1057 = vld [vmem:[#allocation8 + $0x2a8] sm:$0xff]
          %v1058 = vld [vmem:[#allocation8 + $0x2b0] sm:$0xff]
          %v1059 = vld [vmem:[#allocation8 + $0x2b8] sm:$0xff]
          %v1060 = vld [vmem:[#allocation8 + $0x2c0] sm:$0xff]
          %v1061 = vld [vmem:[#allocation8 + $0x2c8] sm:$0xff]
          %v1062 = vld [vmem:[#allocation8 + $0x2d0] sm:$0xff]
          %v1063 = vld [vmem:[#allocation8 + $0x2d8] sm:$0xff]
          %v1064 = vld [vmem:[#allocation8 + $0x2e0] sm:$0xff]
          %v1065 = vld [vmem:[#allocation8 + $0x2e8] sm:$0xff]
          %v1066 = vld [vmem:[#allocation8 + $0x2f0] sm:$0xff]
          %v1067 = vld [vmem:[#allocation8 + $0x2f8] sm:$0xff]
          %v1068 = vld [vmem:[#allocation8 + $0x300] sm:$0xff]
          %v1069 = vld [vmem:[#allocation8 + $0x308] sm:$0xff]
          %v1070 = vld [vmem:[#allocation8 + $0x310] sm:$0xff]
          %v1071 = vld [vmem:[#allocation8 + $0x318] sm:$0xff]
          %v1072 = vld [vmem:[#allocation8 + $0x320] sm:$0xff]
          %v1073 = vld [vmem:[#allocation8 + $0x328] sm:$0xff]
          %v1074 = vld [vmem:[#allocation8 + $0x330] sm:$0xff]
          %v1075 = vld [vmem:[#allocation8 + $0x338] sm:$0xff]
          %v1076 = vld [vmem:[#allocation8 + $0x340] sm:$0xff]
          %v1077 = vld [vmem:[#allocation8 + $0x348] sm:$0xff]
          %v1078 = vld [vmem:[#allocation8 + $0x350] sm:$0xff]
          %v1079 = vld [vmem:[#allocation8 + $0x358] sm:$0xff]
          %v1080 = vld [vmem:[#allocation8 + $0x360] sm:$0xff]
          %v1081 = vld [vmem:[#allocation8 + $0x368] sm:$0xff]
          %v1082 = vld [vmem:[#allocation8 + $0x370] sm:$0xff]
          %v1083 = vld [vmem:[#allocation8 + $0x378] sm:$0xff]
          %v1084 = vld [vmem:[#allocation8 + $0x380] sm:$0xff]
          %v1085 = vld [vmem:[#allocation8 + $0x388] sm:$0xff]
          %v1086 = vld [vmem:[#allocation8 + $0x390] sm:$0xff]
          %v1087 = vld [vmem:[#allocation8 + $0x398] sm:$0xff]
          %v1088 = vld [vmem:[#allocation8 + $0x3a0] sm:$0xff]
          %v1089 = vld [vmem:[#allocation8 + $0x3a8] sm:$0xff]
          %v1090 = vld [vmem:[#allocation8 + $0x3b0] sm:$0xff]
          %v1091 = vld [vmem:[#allocation8 + $0x3b8] sm:$0xff]
          %v1092 = vld [vmem:[#allocation8 + $0x3c0] sm:$0xff]
          %v1093 = vld [vmem:[#allocation8 + $0x3c8] sm:$0xff]
          %v1094 = vld [vmem:[#allocation8 + $0x3d0] sm:$0xff]
          %v1095 = vld [vmem:[#allocation8 + $0x3d8] sm:$0xff]
          %v1096 = vld [vmem:[#allocation8 + $0x3e0] sm:$0xff]
          %v1097 = vld [vmem:[#allocation8 + $0x3e8] sm:$0xff]
          %v1098 = vld [vmem:[#allocation8 + $0x3f0] sm:$0xff]
          %v1099 = vld [vmem:[#allocation8 + $0x3f8] sm:$0xff]
          %v1100 = vld [vmem:[#allocation8 + $0x400] sm:$0xff]
          %v1101 = vld [vmem:[#allocation8 + $0x408] sm:$0xff]
          %v1102 = vld [vmem:[#allocation8 + $0x410] sm:$0xff]
          %v1103 = vld [vmem:[#allocation8 + $0x418] sm:$0xff]
          %v1104 = vld [vmem:[#allocation8 + $0x420] sm:$0xff]
          %v1105 = vld [vmem:[#allocation8 + $0x428] sm:$0xff]
          %v1106 = vld [vmem:[#allocation8 + $0x430] sm:$0xff]
          %v1107 = vld [vmem:[#allocation8 + $0x438] sm:$0xff]
          %v1108 = vld [vmem:[#allocation8 + $0x440] sm:$0xff]
          %v1109 = vld [vmem:[#allocation8 + $0x448] sm:$0xff]
          %v1110 = vld [vmem:[#allocation8 + $0x450] sm:$0xff]
          %v1111 = vld [vmem:[#allocation8 + $0x458] sm:$0xff]
          %v1112 = vld [vmem:[#allocation8 + $0x460] sm:$0xff]
          %v1113 = vld [vmem:[#allocation8 + $0x468] sm:$0xff]
          %v1114 = vld [vmem:[#allocation8 + $0x470] sm:$0xff]
          %v1115 = vld [vmem:[#allocation8 + $0x478] sm:$0xff]
          %v1116 = vld [vmem:[#allocation8 + $0x480] sm:$0xff]
          %v1117 = vld [vmem:[#allocation8 + $0x488] sm:$0xff]
          %v1118 = vld [vmem:[#allocation8 + $0x490] sm:$0xff]
          %v1119 = vld [vmem:[#allocation8 + $0x498] sm:$0xff]
          %v1120 = vld [vmem:[#allocation8 + $0x4a0] sm:$0xff]
          %v1121 = vld [vmem:[#allocation8 + $0x4a8] sm:$0xff]
          %v1122 = vld [vmem:[#allocation8 + $0x4b0] sm:$0xff]
          %v1123 = vld [vmem:[#allocation8 + $0x4b8] sm:$0xff]
          %v1124 = vld [vmem:[#allocation8 + $0x4c0] sm:$0xff]
          %v1125 = vld [vmem:[#allocation8 + $0x4c8] sm:$0xff]
          %v1126 = vld [vmem:[#allocation8 + $0x4d0] sm:$0xff]
          %v1127 = vld [vmem:[#allocation8 + $0x4d8] sm:$0xff]
          %v1128 = vld [vmem:[#allocation8 + $0x4e0] sm:$0xff]
          %v1129 = vld [vmem:[#allocation8 + $0x4e8] sm:$0xff]
          %v1130 = vld [vmem:[#allocation8 + $0x4f0] sm:$0xff]
          %v1131 = vld [vmem:[#allocation8 + $0x4f8] sm:$0xff]
          %v1132 = vld [vmem:[#allocation8 + $0x500] sm:$0xff]
          %v1133 = vld [vmem:[#allocation8 + $0x508] sm:$0xff]
          %v1134 = vld [vmem:[#allocation8 + $0x510] sm:$0xff]
          %v1135 = vld [vmem:[#allocation8 + $0x518] sm:$0xff]
          %v1136 = vld [vmem:[#allocation8 + $0x520] sm:$0xff]
          %v1137 = vld [vmem:[#allocation8 + $0x528] sm:$0xff]
          %v1138 = vld [vmem:[#allocation8 + $0x530] sm:$0xff]
          %v1139 = vld [vmem:[#allocation8 + $0x538] sm:$0xff]
          %v1140 = vld [vmem:[#allocation8 + $0x540] sm:$0xff]
          %v1141 = vld [vmem:[#allocation8 + $0x548] sm:$0xff]
          %v1142 = vld [vmem:[#allocation8 + $0x550] sm:$0xff]
          %v1143 = vld [vmem:[#allocation8 + $0x558] sm:$0xff]
          %v1144 = vld [vmem:[#allocation8 + $0x560] sm:$0xff]
          %v1145 = vld [vmem:[#allocation8 + $0x568] sm:$0xff]
          %v1146 = vld [vmem:[#allocation8 + $0x570] sm:$0xff]
          %v1147 = vld [vmem:[#allocation8 + $0x578] sm:$0xff]
          %v1148 = vld [vmem:[#allocation8 + $0x580] sm:$0xff]
          %v1149 = vld [vmem:[#allocation8 + $0x588] sm:$0xff]
          %v1150 = vld [vmem:[#allocation8 + $0x590] sm:$0xff]
          %v1151 = vld [vmem:[#allocation8 + $0x598] sm:$0xff]
          %v1152 = vld [vmem:[#allocation8 + $0x5a0] sm:$0xff]
          %v1153 = vld [vmem:[#allocation8 + $0x5a8] sm:$0xff]
          %v1154 = vld [vmem:[#allocation8 + $0x5b0] sm:$0xff]
          %v1155 = vld [vmem:[#allocation8 + $0x5b8] sm:$0xff]
          %v1156 = vld [vmem:[#allocation8 + $0x5c0] sm:$0xff]
          %v1157 = vld [vmem:[#allocation8 + $0x5c8] sm:$0xff]
          %v1158 = vld [vmem:[#allocation8 + $0x5d0] sm:$0xff]
          %v1159 = vld [vmem:[#allocation8 + $0x5d8] sm:$0xff]
          %v1160 = vld [vmem:[#allocation8 + $0x5e0] sm:$0xff]
          %v1161 = vld [vmem:[#allocation8 + $0x5e8] sm:$0xff]
          %v1162 = vld [vmem:[#allocation8 + $0x5f0] sm:$0xff]
          %v1163 = vld [vmem:[#allocation8 + $0x5f8] sm:$0xff]
          %v1164 = vld [vmem:[#allocation8 + $0x600] sm:$0xff]
          %v1165 = vld [vmem:[#allocation8 + $0x608] sm:$0xff]
          %v1166 = vld [vmem:[#allocation8 + $0x610] sm:$0xff]
          %v1167 = vld [vmem:[#allocation8 + $0x618] sm:$0xff]
          %v1168 = vld [vmem:[#allocation8 + $0x620] sm:$0xff]
          %v1169 = vld [vmem:[#allocation8 + $0x628] sm:$0xff]
          %v1170 = vld [vmem:[#allocation8 + $0x630] sm:$0xff]
          %v1171 = vld [vmem:[#allocation8 + $0x638] sm:$0xff]
          %v1172 = vld [vmem:[#allocation8 + $0x640] sm:$0xff]
          %v1173 = vld [vmem:[#allocation8 + $0x648] sm:$0xff]
          %v1174 = vld [vmem:[#allocation8 + $0x650] sm:$0xff]
          %v1175 = vld [vmem:[#allocation8 + $0x658] sm:$0xff]
          %v1176 = vld [vmem:[#allocation8 + $0x660] sm:$0xff]
          %v1177 = vld [vmem:[#allocation8 + $0x668] sm:$0xff]
          %v1178 = vld [vmem:[#allocation8 + $0x670] sm:$0xff]
          %v1179 = vld [vmem:[#allocation8 + $0x678] sm:$0xff]
          %v1180 = vld [vmem:[#allocation8 + $0x680] sm:$0xff]
          %v1181 = vld [vmem:[#allocation8 + $0x688] sm:$0xff]
          %v1182 = vld [vmem:[#allocation8 + $0x690] sm:$0xff]
          %v1183 = vld [vmem:[#allocation8 + $0x698] sm:$0xff]
          %v1184 = vld [vmem:[#allocation8 + $0x6a0] sm:$0xff]
          %v1185 = vld [vmem:[#allocation8 + $0x6a8] sm:$0xff]
          %v1186 = vld [vmem:[#allocation8 + $0x6b0] sm:$0xff]
          %v1187 = vld [vmem:[#allocation8 + $0x6b8] sm:$0xff]
          %v1188 = vld [vmem:[#allocation8 + $0x6c0] sm:$0xff]
          %v1189 = vld [vmem:[#allocation8 + $0x6c8] sm:$0xff]
          %v1190 = vld [vmem:[#allocation8 + $0x6d0] sm:$0xff]
          %v1191 = vld [vmem:[#allocation8 + $0x6d8] sm:$0xff]
          %v1192 = vld [vmem:[#allocation8 + $0x6e0] sm:$0xff]
          %v1193 = vld [vmem:[#allocation8 + $0x6e8] sm:$0xff]
          %v1194 = vld [vmem:[#allocation8 + $0x6f0] sm:$0xff]
          %v1195 = vld [vmem:[#allocation8 + $0x6f8] sm:$0xff]
          %v1196 = vld [vmem:[#allocation8 + $0x700] sm:$0xff]
          %v1197 = vld [vmem:[#allocation8 + $0x708] sm:$0xff]
          %v1198 = vld [vmem:[#allocation8 + $0x710] sm:$0xff]
          %v1199 = vld [vmem:[#allocation8 + $0x718] sm:$0xff]
          %v1200 = vld [vmem:[#allocation8 + $0x720] sm:$0xff]
          %v1201 = vld [vmem:[#allocation8 + $0x728] sm:$0xff]
          %v1202 = vld [vmem:[#allocation8 + $0x730] sm:$0xff]
          %v1203 = vld [vmem:[#allocation8 + $0x738] sm:$0xff]
          %v1204 = vld [vmem:[#allocation8 + $0x740] sm:$0xff]
          %v1205 = vld [vmem:[#allocation8 + $0x748] sm:$0xff]
          %v1206 = vld [vmem:[#allocation8 + $0x750] sm:$0xff]
          %v1207 = vld [vmem:[#allocation8 + $0x758] sm:$0xff]
          %v1208 = vld [vmem:[#allocation8 + $0x760] sm:$0xff]
          %v1209 = vld [vmem:[#allocation8 + $0x768] sm:$0xff]
          %v1210 = vld [vmem:[#allocation8 + $0x770] sm:$0xff]
          %v1211 = vld [vmem:[#allocation8 + $0x778] sm:$0xff]
          %v1212 = vld [vmem:[#allocation8 + $0x780] sm:$0xff]
          %v1213 = vld [vmem:[#allocation8 + $0x788] sm:$0xff]
          %v1214 = vld [vmem:[#allocation8 + $0x790] sm:$0xff]
          %v1215 = vld [vmem:[#allocation8 + $0x798] sm:$0xff]
          %v1216 = vld [vmem:[#allocation8 + $0x7a0] sm:$0xff]
          %v1217 = vld [vmem:[#allocation8 + $0x7a8] sm:$0xff]
          %v1218 = vld [vmem:[#allocation8 + $0x7b0] sm:$0xff]
          %v1219 = vld [vmem:[#allocation8 + $0x7b8] sm:$0xff]
          %v1220 = vld [vmem:[#allocation8 + $0x7c0] sm:$0xff]
          %v1221 = vld [vmem:[#allocation8 + $0x7c8] sm:$0xff]
          %v1222 = vld [vmem:[#allocation8 + $0x7d0] sm:$0xff]
          %v1223 = vld [vmem:[#allocation8 + $0x7d8] sm:$0xff]
          %v1224 = vld [vmem:[#allocation8 + $0x7e0] sm:$0xff]
          %v1225 = vld [vmem:[#allocation8 + $0x7e8] sm:$0xff]
          %v1226 = vld [vmem:[#allocation8 + $0x7f0] sm:$0xff]
          %v1227 = vld [vmem:[#allocation8 + $0x7f8] sm:$0xff]
          %v1228 = vld [vmem:[#allocation9] sm:$0xff]
          %v1230 = vlaneseq
          %v1231 = vshrl.u32 %v1230, 7
          %v1232 = vsub.s32 0, %v1231
          %v1233 = vrot.slane %v1228, %v1232
          %v1234 = vlaneseq
          %v1235 = vshrl.u32 %v1234, 7
          %v1236 = vsub.s32 1, %v1235
          %v1237 = vrot.slane %v1228, %v1236
          %v1238 = vlaneseq
          %v1239 = vshrl.u32 %v1238, 7
          %v1240 = vsub.s32 2, %v1239
          %v1241 = vrot.slane %v1228, %v1240
          %v1242 = vlaneseq
          %v1243 = vshrl.u32 %v1242, 7
          %v1244 = vsub.s32 3, %v1243
          %v1245 = vrot.slane %v1228, %v1244
          %v1246 = vlaneseq
          %v1247 = vshrl.u32 %v1246, 7
          %v1248 = vsub.s32 4, %v1247
          %v1249 = vrot.slane %v1228, %v1248
          %v1250 = vlaneseq
          %v1251 = vshrl.u32 %v1250, 7
          %v1252 = vsub.s32 5, %v1251
          %v1253 = vrot.slane %v1228, %v1252
          %v1254 = vlaneseq
          %v1255 = vshrl.u32 %v1254, 7
          %v1256 = vsub.s32 6, %v1255
          %v1257 = vrot.slane %v1228, %v1256
          %v1258 = vlaneseq
          %v1259 = vshrl.u32 %v1258, 7
          %v1260 = vsub.s32 7, %v1259
          %v1261 = vrot.slane %v1228, %v1260
          %1270 = vmatprep.subr.mxu0 %v973
          %1271 = vmatpush1.msra.mxu0 %v972
          %1272 = vmatprep.subr.mxu0 %v981
          %1273 = vmatpush1.msra.mxu0 %v980
          %1274 = vmatprep.subr.mxu0 %v989
          %1275 = vmatpush1.msra.mxu0 %v988
          %1276 = vmatprep.subr.mxu0 %v997
          %1277 = vmatpush1.msra.mxu0 %v996
          %1278 = vmatprep.subr.mxu0 %v1005
          %1279 = vmatpush1.msra.mxu0 %v1004
          %1280 = vmatprep.subr.mxu0 %v1013
          %1281 = vmatpush1.msra.mxu0 %v1012
          %1282 = vmatprep.subr.mxu0 %v1021
          %1283 = vmatpush1.msra.mxu0 %v1020
          %1284 = vmatprep.subr.mxu0 %v1029
          %1285 = vmatpush1.msra.mxu0 %v1028
          %1286 = vmatprep.subr.mxu0 %v1037
          %1287 = vmatpush1.msra.mxu0 %v1036
          %1288 = vmatprep.subr.mxu0 %v1045
          %1289 = vmatpush1.msra.mxu0 %v1044
          %1290 = vmatprep.subr.mxu0 %v1053
          %1291 = vmatpush1.msra.mxu0 %v1052
          %1292 = vmatprep.subr.mxu0 %v1061
          %1293 = vmatpush1.msra.mxu0 %v1060
          %1294 = vmatprep.subr.mxu0 %v1069
          %1295 = vmatpush1.msra.mxu0 %v1068
          %1296 = vmatprep.subr.mxu0 %v1077
          %1297 = vmatpush1.msra.mxu0 %v1076
          %1298 = vmatprep.subr.mxu0 %v1085
          %1299 = vmatpush1.msra.mxu0 %v1084
          %1300 = vmatprep.subr.mxu0 %v1093
          %1301 = vmatpush1.msra.mxu0 %v1092
          %1302 = vmatprep.subr.mxu0 %v1101
          %1303 = vmatpush1.msra.mxu0 %v1100
          %1304 = vmatprep.subr.mxu0 %v1109
          %1305 = vmatpush1.msra.mxu0 %v1108
          %1306 = vmatprep.subr.mxu0 %v1117
          %1307 = vmatpush1.msra.mxu0 %v1116
          %1308 = vmatprep.subr.mxu0 %v1125
          %1309 = vmatpush1.msra.mxu0 %v1124
          %1310 = vmatprep.subr.mxu0 %v1133
          %1311 = vmatpush1.msra.mxu0 %v1132
          %1312 = vmatprep.subr.mxu0 %v1141
          %1313 = vmatpush1.msra.mxu0 %v1140
          %1314 = vmatprep.subr.mxu0 %v1149
          %1315 = vmatpush1.msra.mxu0 %v1148
          %1316 = vmatprep.subr.mxu0 %v1157
          %1317 = vmatpush1.msra.mxu0 %v1156
          %1318 = vmatprep.subr.mxu0 %v1165
          %1319 = vmatpush1.msra.mxu0 %v1164
          %1320 = vmatprep.subr.mxu0 %v1173
          %1321 = vmatpush1.msra.mxu0 %v1172
          %1322 = vmatprep.subr.mxu0 %v1181
          %1323 = vmatpush1.msra.mxu0 %v1180
          %1324 = vmatprep.subr.mxu0 %v1189
          %1325 = vmatpush1.msra.mxu0 %v1188
          %1326 = vmatprep.subr.mxu0 %v1197
          %1327 = vmatpush1.msra.mxu0 %v1196
          %1328 = vmatprep.subr.mxu0 %v1205
          %1329 = vmatpush1.msra.mxu0 %v1204
          %1330 = vmatprep.subr.mxu0 %v1213
          %1331 = vmatpush1.msra.mxu0 %v1212
          %1332 = vmatprep.subr.mxu0 %v1221
          %1333 = vmatpush1.msra.mxu0 %v1220
          %1334 = vmatprep.mubr.f32.mxu0 %v954
          %1335 = vmatmul.mubr.f32.gmra.mrb[0].mxu0 %v953
          %v1336 = vpop.f32.mrb[0].mxu0
          %v1337 = vadd.f32 %v1233, %v1336
          %v1338 = vpop.f32.mrb[0].mxu0
          %v1339 = vadd.f32 %v1237, %v1338
          %1340 = vmatprep.mubr.f32.mxu0 %v956
          %1341 = vmatmul.mubr.f32.gmra.mrb[0].mxu0 %v955
          %v1342 = vpop.f32.mrb[0].mxu0
          %v1343 = vadd.f32 %v1233, %v1342
          %v1344 = vpop.f32.mrb[0].mxu0
          %v1345 = vadd.f32 %v1237, %v1344
          %1346 = vdwg.mxu0
          %1347 = vmatprep.subr.mxu0 %v975
          %1348 = vmatpush1.msra.mxu0 %v974
          %1349 = vmatprep.subr.mxu0 %v983
          %1350 = vmatpush1.msra.mxu0 %v982
          %1351 = vmatprep.subr.mxu0 %v991
          %1352 = vmatpush1.msra.mxu0 %v990
          %1353 = vmatprep.subr.mxu0 %v999
          %1354 = vmatpush1.msra.mxu0 %v998
          %1355 = vmatprep.subr.mxu0 %v1007
          %1356 = vmatpush1.msra.mxu0 %v1006
          %1357 = vmatprep.subr.mxu0 %v1015
          %1358 = vmatpush1.msra.mxu0 %v1014
          %1359 = vmatprep.subr.mxu0 %v1023
          %1360 = vmatpush1.msra.mxu0 %v1022
          %1361 = vmatprep.subr.mxu0 %v1031
          %1362 = vmatpush1.msra.mxu0 %v1030
          %1363 = vmatprep.subr.mxu0 %v1039
          %1364 = vmatpush1.msra.mxu0 %v1038
          %1365 = vmatprep.subr.mxu0 %v1047
          %1366 = vmatpush1.msra.mxu0 %v1046
          %1367 = vmatprep.subr.mxu0 %v1055
          %1368 = vmatpush1.msra.mxu0 %v1054
          %1369 = vmatprep.subr.mxu0 %v1063
          %1370 = vmatpush1.msra.mxu0 %v1062
          %1371 = vmatprep.subr.mxu0 %v1071
          %1372 = vmatpush1.msra.mxu0 %v1070
          %1373 = vmatprep.subr.mxu0 %v1079
          %1374 = vmatpush1.msra.mxu0 %v1078
          %1375 = vmatprep.subr.mxu0 %v1087
          %1376 = vmatpush1.msra.mxu0 %v1086
          %1377 = vmatprep.subr.mxu0 %v1095
          %1378 = vmatpush1.msra.mxu0 %v1094
          %1379 = vmatprep.subr.mxu0 %v1103
          %1380 = vmatpush1.msra.mxu0 %v1102
          %1381 = vmatprep.subr.mxu0 %v1111
          %1382 = vmatpush1.msra.mxu0 %v1110
          %1383 = vmatprep.subr.mxu0 %v1119
          %1384 = vmatpush1.msra.mxu0 %v1118
          %1385 = vmatprep.subr.mxu0 %v1127
          %1386 = vmatpush1.msra.mxu0 %v1126
          %1387 = vmatprep.subr.mxu0 %v1135
          %1388 = vmatpush1.msra.mxu0 %v1134
          %1389 = vmatprep.subr.mxu0 %v1143
          %1390 = vmatpush1.msra.mxu0 %v1142
          %1391 = vmatprep.subr.mxu0 %v1151
          %1392 = vmatpush1.msra.mxu0 %v1150
          %1393 = vmatprep.subr.mxu0 %v1159
          %1394 = vmatpush1.msra.mxu0 %v1158
          %1395 = vmatprep.subr.mxu0 %v1167
          %1396 = vmatpush1.msra.mxu0 %v1166
          %1397 = vmatprep.subr.mxu0 %v1175
          %1398 = vmatpush1.msra.mxu0 %v1174
          %1399 = vmatprep.subr.mxu0 %v1183
          %1400 = vmatpush1.msra.mxu0 %v1182
          %1401 = vmatprep.subr.mxu0 %v1191
          %1402 = vmatpush1.msra.mxu0 %v1190
          %1403 = vmatprep.subr.mxu0 %v1199
          %1404 = vmatpush1.msra.mxu0 %v1198
          %1405 = vmatprep.subr.mxu0 %v1207
          %1406 = vmatpush1.msra.mxu0 %v1206
          %1407 = vmatprep.subr.mxu0 %v1215
          %1408 = vmatpush1.msra.mxu0 %v1214
          %1409 = vmatprep.subr.mxu0 %v1223
          %1410 = vmatpush1.msra.mxu0 %v1222
          %1411 = vmatprep.mubr.f32.mxu0 %v954
          %1412 = vmatmul.mubr.f32.gmra.mrb[0].mxu0 %v953
          %v1413 = vpop.f32.mrb[0].mxu0
          %v1414 = vadd.f32 %v1241, %v1413
          %v1415 = vpop.f32.mrb[0].mxu0
          %v1416 = vadd.f32 %v1245, %v1415
          %1417 = vmatprep.mubr.f32.mxu0 %v956
          %1418 = vmatmul.mubr.f32.gmra.mrb[0].mxu0 %v955
          %v1419 = vpop.f32.mrb[0].mxu0
          %v1420 = vadd.f32 %v1241, %v1419
          %v1421 = vpop.f32.mrb[0].mxu0
          %v1422 = vadd.f32 %v1245, %v1421
          %1423 = vdwg.mxu0
          %1424 = vmatprep.subr.mxu0 %v977
          %1425 = vmatpush1.msra.mxu0 %v976
          %1426 = vmatprep.subr.mxu0 %v985
          %1427 = vmatpush1.msra.mxu0 %v984
          %1428 = vmatprep.subr.mxu0 %v993
          %1429 = vmatpush1.msra.mxu0 %v992
          %1430 = vmatprep.subr.mxu0 %v1001
          %1431 = vmatpush1.msra.mxu0 %v1000
          %1432 = vmatprep.subr.mxu0 %v1009
          %1433 = vmatpush1.msra.mxu0 %v1008
          %1434 = vmatprep.subr.mxu0 %v1017
          %1435 = vmatpush1.msra.mxu0 %v1016
          %1436 = vmatprep.subr.mxu0 %v1025
          %1437 = vmatpush1.msra.mxu0 %v1024
          %1438 = vmatprep.subr.mxu0 %v1033
          %1439 = vmatpush1.msra.mxu0 %v1032
          %1440 = vmatprep.subr.mxu0 %v1041
          %1441 = vmatpush1.msra.mxu0 %v1040
          %1442 = vmatprep.subr.mxu0 %v1049
          %1443 = vmatpush1.msra.mxu0 %v1048
          %1444 = vmatprep.subr.mxu0 %v1057
          %1445 = vmatpush1.msra.mxu0 %v1056
          %1446 = vmatprep.subr.mxu0 %v1065
          %1447 = vmatpush1.msra.mxu0 %v1064
          %1448 = vmatprep.subr.mxu0 %v1073
          %1449 = vmatpush1.msra.mxu0 %v1072
          %1450 = vmatprep.subr.mxu0 %v1081
          %1451 = vmatpush1.msra.mxu0 %v1080
          %1452 = vmatprep.subr.mxu0 %v1089
          %1453 = vmatpush1.msra.mxu0 %v1088
          %1454 = vmatprep.subr.mxu0 %v1097
          %1455 = vmatpush1.msra.mxu0 %v1096
          %1456 = vmatprep.subr.mxu0 %v1105
          %1457 = vmatpush1.msra.mxu0 %v1104
          %1458 = vmatprep.subr.mxu0 %v1113
          %1459 = vmatpush1.msra.mxu0 %v1112
          %1460 = vmatprep.subr.mxu0 %v1121
          %1461 = vmatpush1.msra.mxu0 %v1120
          %1462 = vmatprep.subr.mxu0 %v1129
          %1463 = vmatpush1.msra.mxu0 %v1128
          %1464 = vmatprep.subr.mxu0 %v1137
          %1465 = vmatpush1.msra.mxu0 %v1136
          %1466 = vmatprep.subr.mxu0 %v1145
          %1467 = vmatpush1.msra.mxu0 %v1144
          %1468 = vmatprep.subr.mxu0 %v1153
          %1469 = vmatpush1.msra.mxu0 %v1152
          %1470 = vmatprep.subr.mxu0 %v1161
          %1471 = vmatpush1.msra.mxu0 %v1160
          %1472 = vmatprep.subr.mxu0 %v1169
          %1473 = vmatpush1.msra.mxu0 %v1168
          %1474 = vmatprep.subr.mxu0 %v1177
          %1475 = vmatpush1.msra.mxu0 %v1176
          %1476 = vmatprep.subr.mxu0 %v1185
          %1477 = vmatpush1.msra.mxu0 %v1184
          %1478 = vmatprep.subr.mxu0 %v1193
          %1479 = vmatpush1.msra.mxu0 %v1192
          %1480 = vmatprep.subr.mxu0 %v1201
          %1481 = vmatpush1.msra.mxu0 %v1200
          %1482 = vmatprep.subr.mxu0 %v1209
          %1483 = vmatpush1.msra.mxu0 %v1208
          %1484 = vmatprep.subr.mxu0 %v1217
          %1485 = vmatpush1.msra.mxu0 %v1216
          %1486 = vmatprep.subr.mxu0 %v1225
          %1487 = vmatpush1.msra.mxu0 %v1224
          %1488 = vmatprep.mubr.f32.mxu0 %v954
          %1489 = vmatmul.mubr.f32.gmra.mrb[0].mxu0 %v953
          %v1490 = vpop.f32.mrb[0].mxu0
          %v1491 = vadd.f32 %v1249, %v1490
          %v1492 = vpop.f32.mrb[0].mxu0
          %v1493 = vadd.f32 %v1253, %v1492
          %1494 = vmatprep.mubr.f32.mxu0 %v956
          %1495 = vmatmul.mubr.f32.gmra.mrb[0].mxu0 %v955
          %v1496 = vpop.f32.mrb[0].mxu0
          %v1497 = vadd.f32 %v1249, %v1496
          %v1498 = vpop.f32.mrb[0].mxu0
          %v1499 = vadd.f32 %v1253, %v1498
          %1500 = vdwg.mxu0
          %1501 = vmatprep.subr.mxu0 %v979
          %1502 = vmatpush1.msra.mxu0 %v978
          %1503 = vmatprep.subr.mxu0 %v987
          %1504 = vmatpush1.msra.mxu0 %v986
          %1505 = vmatprep.subr.mxu0 %v995
          %1506 = vmatpush1.msra.mxu0 %v994
          %1507 = vmatprep.subr.mxu0 %v1003
          %1508 = vmatpush1.msra.mxu0 %v1002
          %1509 = vmatprep.subr.mxu0 %v1011
          %1510 = vmatpush1.msra.mxu0 %v1010
          %1511 = vmatprep.subr.mxu0 %v1019
          %1512 = vmatpush1.msra.mxu0 %v1018
          %1513 = vmatprep.subr.mxu0 %v1027
          %1514 = vmatpush1.msra.mxu0 %v1026
          %1515 = vmatprep.subr.mxu0 %v1035
          %1516 = vmatpush1.msra.mxu0 %v1034
          %1517 = vmatprep.subr.mxu0 %v1043
          %1518 = vmatpush1.msra.mxu0 %v1042
          %1519 = vmatprep.subr.mxu0 %v1051
          %1520 = vmatpush1.msra.mxu0 %v1050
          %1521 = vmatprep.subr.mxu0 %v1059
          %1522 = vmatpush1.msra.mxu0 %v1058
          %1523 = vmatprep.subr.mxu0 %v1067
          %1524 = vmatpush1.msra.mxu0 %v1066
          %1525 = vmatprep.subr.mxu0 %v1075
          %1526 = vmatpush1.msra.mxu0 %v1074
          %1527 = vmatprep.subr.mxu0 %v1083
          %1528 = vmatpush1.msra.mxu0 %v1082
          %1529 = vmatprep.subr.mxu0 %v1091
          %1530 = vmatpush1.msra.mxu0 %v1090
          %1531 = vmatprep.subr.mxu0 %v1099
          %1532 = vmatpush1.msra.mxu0 %v1098
          %1533 = vmatprep.subr.mxu0 %v1107
          %1534 = vmatpush1.msra.mxu0 %v1106
          %1535 = vmatprep.subr.mxu0 %v1115
          %1536 = vmatpush1.msra.mxu0 %v1114
          %1537 = vmatprep.subr.mxu0 %v1123
          %1538 = vmatpush1.msra.mxu0 %v1122
          %1539 = vmatprep.subr.mxu0 %v1131
          %1540 = vmatpush1.msra.mxu0 %v1130
          %1541 = vmatprep.subr.mxu0 %v1139
          %1542 = vmatpush1.msra.mxu0 %v1138
          %1543 = vmatprep.subr.mxu0 %v1147
          %1544 = vmatpush1.msra.mxu0 %v1146
          %1545 = vmatprep.subr.mxu0 %v1155
          %1546 = vmatpush1.msra.mxu0 %v1154
          %1547 = vmatprep.subr.mxu0 %v1163
          %1548 = vmatpush1.msra.mxu0 %v1162
          %1549 = vmatprep.subr.mxu0 %v1171
          %1550 = vmatpush1.msra.mxu0 %v1170
          %1551 = vmatprep.subr.mxu0 %v1179
          %1552 = vmatpush1.msra.mxu0 %v1178
          %1553 = vmatprep.subr.mxu0 %v1187
          %1554 = vmatpush1.msra.mxu0 %v1186
          %1555 = vmatprep.subr.mxu0 %v1195
          %1556 = vmatpush1.msra.mxu0 %v1194
          %1557 = vmatprep.subr.mxu0 %v1203
          %1558 = vmatpush1.msra.mxu0 %v1202
          %1559 = vmatprep.subr.mxu0 %v1211
          %1560 = vmatpush1.msra.mxu0 %v1210
          %1561 = vmatprep.subr.mxu0 %v1219
          %1562 = vmatpush1.msra.mxu0 %v1218
          %1563 = vmatprep.subr.mxu0 %v1227
          %1564 = vmatpush1.msra.mxu0 %v1226
          %1565 = vmatprep.mubr.f32.mxu0 %v954
          %1566 = vmatmul.mubr.f32.gmra.mrb[0].mxu0 %v953
          %v1567 = vpop.f32.mrb[0].mxu0
          %v1568 = vadd.f32 %v1257, %v1567
          %v1569 = vpop.f32.mrb[0].mxu0
          %v1570 = vadd.f32 %v1261, %v1569
          %1571 = vmatprep.mubr.f32.mxu0 %v956
          %1572 = vmatmul.mubr.f32.gmra.mrb[0].mxu0 %v955
          %v1573 = vpop.f32.mrb[0].mxu0
          %v1574 = vadd.f32 %v1257, %v1573
          %v1575 = vpop.f32.mrb[0].mxu0
          %v1576 = vadd.f32 %v1261, %v1575
          %1577 = vdwg.mxu0
          %1578 = vst [vmem:[%s5] sm:$0xff] %v1337
          %1579 = vst [vmem:[%s5 + $0x8] sm:$0xff] %v1339
          %1580 = vst [vmem:[%s5 + $0x10] sm:$0xff] %v1414
          %1581 = vst [vmem:[%s5 + $0x18] sm:$0xff] %v1416
          %1582 = vst [vmem:[%s5 + $0x20] sm:$0xff] %v1491
          %1583 = vst [vmem:[%s5 + $0x28] sm:$0xff] %v1493
          %1584 = vst [vmem:[%s5 + $0x30] sm:$0xff] %v1568
          %1585 = vst [vmem:[%s5 + $0x38] sm:$0xff] %v1570
          %1586 = vst [vmem:[%s5 + $0x40] sm:$0xff] %v1343
          %1587 = vst [vmem:[%s5 + $0x48] sm:$0xff] %v1345
          %1588 = vst [vmem:[%s5 + $0x50] sm:$0xff] %v1420
          %1589 = vst [vmem:[%s5 + $0x58] sm:$0xff] %v1422
          %1590 = vst [vmem:[%s5 + $0x60] sm:$0xff] %v1497
          %1591 = vst [vmem:[%s5 + $0x68] sm:$0xff] %v1499
          %1592 = vst [vmem:[%s5 + $0x70] sm:$0xff] %v1574
          %1593 = vst [vmem:[%s5 + $0x78] sm:$0xff] %v1576
        $region68: #{decoding_layer_forward.1} parent=39 // pred_fallthru
          _
        // Predicated region
        $region69: #{decoding_layer_forward.1} parent=39 // pred_check
          %p1594 = pneg %p151
        $region70: #{decoding_layer_forward.1} parent=39 // pred_check_branch
          %1596 = sbr.rel (%p1594) target = $region72
        $region71: #{decoding_layer_forward.1} parent=39 // pred_region
          _
        $region72: #{decoding_layer_forward.1} parent=39 // pred_fallthru
          _
        // Predicated region
        $region73: #{decoding_layer_forward.1} parent=39 // pred_check
          %p1597 = pneg %p151
        $region74: #{decoding_layer_forward.1} parent=39 // pred_check_branch
          %1599 = sbr.rel (%p1597) target = $region76
        $region75: #{decoding_layer_forward.1} parent=39 // pred_region
          _
        $region76: #{decoding_layer_forward.1} parent=39 // pred_fallthru
          _
      $region40: #{decoding_layer_forward.1} parent=5 // pred_fallthru
        _
      %p1600 = scmp.le.s32.totalorder 2, %s18
      // Predicated region
      $region77: #{decoding_layer_forward.1} parent=5 // pred_check
        %p1601 = pneg %p1600
      $region78: #{decoding_layer_forward.1} parent=5 // pred_check_branch
        %1603 = sbr.rel (%p1601) target = $region80
      $region79: #{decoding_layer_forward.1} parent=5 // pred_region
        %s1604 = ssub.s32 %s18, 2
      $region80: #{decoding_layer_forward.1} parent=5 // pred_fallthru
        _
    $region6: #{decoding_layer_forward.1} parent=1 // loop_footer
      %s22 = sadd.s32 1, %s18
    $region7: #{decoding_layer_forward.1} parent=1 // loop_footer_branch
      %17 = sbr.rel target = $region3
    $region8: #{decoding_layer_forward.1} parent=1 // loop_exit
      _
    %1605 = vsyncpa [#allocation5], 1
    %s1606 = scalar_lea.sflag [#allocation5], 1
    %1607 = vsyncpa %s1606, 1
    %1608 = vsyncpa [#allocation7], 1
    %s1609 = scalar_lea.sflag [#allocation7], 1
    %1610 = vsyncpa %s1609, 1
    %1611 = vsyncpa [#allocation10], 1

</llo_original>
